<compile_context>
chip_gen: v5e
topology: v5e:2x2
jax: 0.10.0
libtpu: 0.0.40
codegen_flags: <defaults>
</compile_context>

<pallas_src>
import functools
import math

import jax
import jax.numpy as jnp
from jax.experimental import pallas as pl
from jax.experimental.pallas import tpu as pltpu

# ----------------------------- configuration -------------------------------
NUM_LAYERS = 4        # GIN layers (3 conv layers + input rep)
NUM_MLP_LAYERS = 5
HIDDEN_DIM = 32
INPUT_DIM = 16
OUT_DIM = 8
OUT_PAD = 128         # lane-dense padded output width (sliced back to OUT_DIM)
EPS_GIN = 0.0         # learn_eps=False, init 0
BN_EPS = 1e-5


# ------------------------------- kernel ------------------------------------
def gin_fused_kernel(a_ref, p_ref, h_ref, w_ref, v_ref, wp_ref, bsum_ref, out_ref):
    """Whole GIN network in one kernel invocation.

    a_ref   : (G*N, G*N) block-diagonal adjacency with (1+eps)*I folded in
    p_ref   : (G, G*N)   per-graph sum-pooling matrix (block rows of ones)
    h_ref   : (G*N, H)   input node features, zero-padded Din -> H
    w_ref   : (L-1, 5, H, H)  BN-folded MLP weights (layer-0 first W zero-row padded)
    v_ref   : (L-1, 8, H)     rows 0..4 = BN-folded biases, 5 = s_out, 6 = t_out
    wp_ref  : (NUM_LAYERS, H, OUT_PAD)  prediction weights (zero padded)
    bsum_ref: (1, OUT_PAD)    sum of all prediction biases (zero padded)
    out_ref : (G, OUT_PAD)
    """
    a = a_ref[...]
    p = p_ref[...]
    x = h_ref[...]

    # readout of hidden_rep[0] (the padded input features)
    pooled = jnp.dot(p, x, preferred_element_type=jnp.float32)
    score = bsum_ref[...] + jnp.dot(pooled, wp_ref[0],
                                    preferred_element_type=jnp.float32)

    for layer in range(NUM_LAYERS - 1):          # 3 GIN layers, fully unrolled
        wl = w_ref[layer]                        # (5, H, H)
        vb = v_ref[layer]                        # (8, H)
        # neighbor sum + (1+eps) self term in one block-diagonal matmul
        x = jnp.dot(a, x, preferred_element_type=jnp.float32)
        # 5-layer MLP; eval-mode BN folded into (W, b); ReLU after every linear
        # (ReLU after the 5th comes from ApplyNodeFunc's BN+ReLU, folded likewise)
        for j in range(NUM_MLP_LAYERS):
            x = jnp.maximum(
                jnp.dot(x, wl[j], preferred_element_type=jnp.float32)
                + vb[j:j + 1, :], 0.0)
        # outer GIN BatchNorm + ReLU
        x = jnp.maximum(x * vb[5:6, :] + vb[6:7, :], 0.0)
        # fused readout epilogue for this layer's hidden rep
        pooled = jnp.dot(p, x, preferred_element_type=jnp.float32)
        score = score + jnp.dot(pooled, wp_ref[layer + 1],
                                preferred_element_type=jnp.float32)

    out_ref[...] = score


# ------------------------------- wrapper ------------------------------------
def gin_forward(A, h, packed):
    """A: (G,N,N) dense adjacency, h: (G,N,Din), packed: pre-packed parameter stacks."""
    G, N, Din = h.shape
    GN = G * N
    H = HIDDEN_DIM
    dt = jnp.float32

    # Block-diagonal adjacency with the (1+eps)*I self term folded in (built once
    # per forward; (G*N)^2 is tiny).
    A_hat = A + (1.0 + EPS_GIN) * jnp.eye(N, dtype=dt)
    A_bd = jnp.einsum('gh,gij->gihj', jnp.eye(G, dtype=dt), A_hat).reshape(GN, GN)
    # Per-graph sum-pooling matrix: row g has ones on that graph's node columns.
    P = jnp.kron(jnp.eye(G, dtype=dt), jnp.ones((1, N), dt))
    # Stack graphs; zero-pad feature dim Din -> H so one weight stack serves all layers.
    h_pad = jnp.pad(h.reshape(GN, Din).astype(dt), ((0, 0), (0, H - Din)))

    out = pl.pallas_call(
        gin_fused_kernel,
        out_shape=jax.ShapeDtypeStruct((G, OUT_PAD), jnp.float32),
        grid=(1,),
        in_specs=[
            pl.BlockSpec((GN, GN), lambda i: (0, 0)),
            pl.BlockSpec((G, GN), lambda i: (0, 0)),
            pl.BlockSpec((GN, H), lambda i: (0, 0)),
            pl.BlockSpec(packed['W'].shape, lambda i: (0, 0, 0, 0)),
            pl.BlockSpec(packed['V'].shape, lambda i: (0, 0, 0)),
            pl.BlockSpec(packed['WP'].shape, lambda i: (0, 0, 0)),
            pl.BlockSpec(packed['BSUM'].shape, lambda i: (0, 0)),
        ],
        out_specs=pl.BlockSpec((G, OUT_PAD), lambda i: (0, 0)),
        compiler_params=pltpu.CompilerParams(
            dimension_semantics=("arbitrary",)),
    )(A_bd, P, h_pad, packed['W'], packed['V'], packed['WP'], packed['BSUM'])

    return out[:, :OUT_DIM]


# --------------------------- parameter packing -------------------------------
def pack_params(params):
    """Fold eval-mode BN into the linears and pack everything into 4 dense stacks.

    Folding: (x @ W + b) * s + t  ==  x @ (W*s) + (b*s + t).
    Done ONCE outside the jitted forward.
    """
    H = HIDDEN_DIM
    W_layers, V_layers = [], []
    for layer in range(NUM_LAYERS - 1):
        lp = params['gin_layers'][layer]
        ws, vs = [], []
        for j in range(NUM_MLP_LAYERS):
            w, b = lp['lin'][j]
            s, t = lp['bn_mlp'][j] if j < NUM_MLP_LAYERS - 1 else lp['bn_apply']
            wf = w * s                                   # (din, H)
            bf = b * s + t                               # (1, H)
            if wf.shape[0] < H:                          # layer-0 first linear
                wf = jnp.pad(wf, ((0, H - wf.shape[0]), (0, 0)))
            ws.append(wf)
            vs.append(bf)
        s_out, t_out = lp['bn_outer']
        vs.extend([s_out, t_out, jnp.zeros((1, H), jnp.float32)])   # pad to 8 rows
        W_layers.append(jnp.stack(ws))                   # (5, H, H)
        V_layers.append(jnp.concatenate(vs, axis=0))     # (8, H)
    W_stack = jnp.stack(W_layers)                        # (L-1, 5, H, H)
    V_stack = jnp.stack(V_layers)                        # (L-1, 8, H)

    wp_list = []
    b_sum = jnp.zeros((1, OUT_PAD), jnp.float32)
    for i in range(NUM_LAYERS):
        w, b = params['pred'][i]                         # (din, OUT), (1, OUT)
        wpad = jnp.zeros((H, OUT_PAD), jnp.float32).at[:w.shape[0], :OUT_DIM].set(w)
        wp_list.append(wpad)
        b_sum = b_sum.at[:, :OUT_DIM].add(b)
    WP = jnp.stack(wp_list)                              # (NUM_LAYERS, H, OUT_PAD)

    return {'W': W_stack, 'V': V_stack, 'WP': WP, 'BSUM': b_sum}


# ---------------------------- parameter init --------------------------------
def init_linear(key, din, dout):
    k1, k2 = jax.random.split(key)
    bound = 1.0 / math.sqrt(din)
    w = jax.random.uniform(k1, (din, dout), jnp.float32, -bound, bound)
    b = jax.random.uniform(k2, (1, dout), jnp.float32, -bound, bound)
    return w, b


def init_bn(key, d):
    # eval-mode BatchNorm folded into per-channel scale/shift:
    #   s = gamma / sqrt(var + eps), t = beta - mean * s
    k1, k2, k3, k4 = jax.random.split(key, 4)
    gamma = 1.0 + 0.1 * jax.random.normal(k1, (1, d), jnp.float32)
    beta = 0.1 * jax.random.normal(k2, (1, d), jnp.float32)
    mean = 0.1 * jax.random.normal(k3, (1, d), jnp.float32)
    var = jnp.abs(jax.random.normal(k4, (1, d), jnp.float32)) + 0.5
    s = gamma / jnp.sqrt(var + BN_EPS)
    t = beta - mean * s
    return s, t


def init_params(key):
    params = {'gin_layers': [], 'pred': []}
    for layer in range(NUM_LAYERS - 1):
        lp = {'lin': [], 'bn_mlp': []}
        din = INPUT_DIM if layer == 0 else HIDDEN_DIM
        dims = [din] + [HIDDEN_DIM] * NUM_MLP_LAYERS
        for j in range(NUM_MLP_LAYERS):
            key, k = jax.random.split(key)
            lp['lin'].append(init_linear(k, dims[j], dims[j + 1]))
        for j in range(NUM_MLP_LAYERS - 1):
            key, k = jax.random.split(key)
            lp['bn_mlp'].append(init_bn(k, HIDDEN_DIM))
        key, k = jax.random.split(key)
        lp['bn_apply'] = init_bn(k, HIDDEN_DIM)      # ApplyNodeFunc BN
        key, k = jax.random.split(key)
        lp['bn_outer'] = init_bn(k, HIDDEN_DIM)      # GIN outer BN
        params['gin_layers'].append(lp)
    for layer in range(NUM_LAYERS):
        din = INPUT_DIM if layer == 0 else HIDDEN_DIM
        key, k = jax.random.split(key)
        params['pred'].append(init_linear(k, din, OUT_DIM))
    return params


# ---------------------------- pure-JAX reference ----------------------------
def gin_reference(A, h, params):
    G, N, _ = h.shape
    hidden_rep = [h]
    cur = h
    for layer in range(NUM_LAYERS - 1):
        lp = params['gin_layers'][layer]
        agg = (1.0 + EPS_GIN) * cur + jnp.einsum('gij,gjd->gid', A, cur)
        x = agg.reshape(G * N, -1)
        for j in range(NUM_MLP_LAYERS - 1):
            w, b = lp['lin'][j]
            s, t = lp['bn_mlp'][j]
            x = jnp.maximum((x @ w + b) * s + t, 0.0)
        w, b = lp['lin'][-1]
        s, t = lp['bn_apply']
        x = jnp.maximum((x @ w + b) * s + t, 0.0)
        s, t = lp['bn_outer']
        x = jnp.maximum(x * s + t, 0.0)
        cur = x.reshape(G, N, HIDDEN_DIM)
        hidden_rep.append(cur)
    score = jnp.zeros((G, OUT_DIM), jnp.float32)
    for i, hr in enumerate(hidden_rep):
        p = hr.sum(axis=1)
        w, b = params['pred'][i]
        score = score + (p @ w + b)
    return score


# --------------------------------- main -------------------------------------
if __name__ == "__main__":
    key = jax.random.PRNGKey(0)
    k_adj, k_feat, k_par = jax.random.split(key, 3)

    G, N = 2, 16
    # dense adjacency (binary, no self loops), float for MXU matmul
    A = jax.random.bernoulli(k_adj, 0.3, (G, N, N)).astype(jnp.float32)
    A = A * (1.0 - jnp.eye(N, dtype=jnp.float32)[None])
    h = jax.random.normal(k_feat, (G, N, INPUT_DIM), jnp.float32)

    params = init_params(k_par)
    packed = pack_params(params)     # BN folding + weight packing, once, outside jit

    fwd = jax.jit(gin_forward)
    out = fwd(A, h, packed)
    out = jax.block_until_ready(out)

    ref = gin_reference(A, h, params)
    assert out.shape == (G, OUT_DIM)
    assert jnp.allclose(out, ref, atol=1e-3, rtol=1e-3), "mismatch vs reference"

    print("KERNEL_OK")
</pallas_src>

<mosaic_0001>
module attributes {stable_mosaic.version = 11 : i64} {
  func.func @gin_fused_kernel(%arg0: i32, %arg1: memref<32x32xf32, #tpu.memory_space<vmem>>, %arg2: memref<2x32xf32, #tpu.memory_space<vmem>>, %arg3: memref<32x32xf32, #tpu.memory_space<vmem>>, %arg4: memref<3x5x32x32xf32, #tpu.memory_space<vmem>>, %arg5: memref<3x8x32xf32, #tpu.memory_space<vmem>>, %arg6: memref<4x32x128xf32, #tpu.memory_space<vmem>>, %arg7: memref<1x128xf32, #tpu.memory_space<vmem>>, %arg8: memref<2x128xf32, #tpu.memory_space<vmem>>) attributes {dimension_semantics = [#tpu.dimension_semantics<arbitrary>], iteration_bounds = array<i64: 1>, scalar_prefetch = 0 : i64, scratch_operands = 0 : i64, tpu.core_type = #tpu.core_type<tc>, window_params = [{pipeline_mode = #tpu.pipeline_mode<synchronous>, transform_indices = @transform_0, window_bounds = array<i64: 32, 32>}, {pipeline_mode = #tpu.pipeline_mode<synchronous>, transform_indices = @transform_1, window_bounds = array<i64: 2, 32>}, {pipeline_mode = #tpu.pipeline_mode<synchronous>, transform_indices = @transform_2, window_bounds = array<i64: 32, 32>}, {pipeline_mode = #tpu.pipeline_mode<synchronous>, transform_indices = @transform_3, window_bounds = array<i64: 3, 5, 32, 32>}, {pipeline_mode = #tpu.pipeline_mode<synchronous>, transform_indices = @transform_4, window_bounds = array<i64: 3, 8, 32>}, {pipeline_mode = #tpu.pipeline_mode<synchronous>, transform_indices = @transform_5, window_bounds = array<i64: 4, 32, 128>}, {pipeline_mode = #tpu.pipeline_mode<synchronous>, transform_indices = @transform_6, window_bounds = array<i64: 1, 128>}, {pipeline_mode = #tpu.pipeline_mode<synchronous>, transform_indices = @transform_7, window_bounds = array<i64: 2, 128>}]} {
    %c0 = arith.constant 0 : index
    %c0_0 = arith.constant 0 : index
    %0 = vector.load %arg1[%c0, %c0_0] : memref<32x32xf32, #tpu.memory_space<vmem>>, vector<32x32xf32>
    %c0_1 = arith.constant 0 : index
    %c0_2 = arith.constant 0 : index
    %1 = vector.load %arg2[%c0_1, %c0_2] : memref<2x32xf32, #tpu.memory_space<vmem>>, vector<2x32xf32>
    %c0_3 = arith.constant 0 : index
    %c0_4 = arith.constant 0 : index
    %2 = vector.load %arg3[%c0_3, %c0_4] : memref<32x32xf32, #tpu.memory_space<vmem>>, vector<32x32xf32>
    %cst = arith.constant dense<0.000000e+00> : vector<2x32xf32>
    %3 = tpu.matmul %1, %2, %cst {dimension_numbers = #tpu.dot_dimension_numbers<[1], [0], [0], [1], [0, 0, 1, 1], [], []>} : vector<2x32xf32>, vector<32x32xf32>, vector<2x32xf32> -> vector<2x32xf32>
    %c0_5 = arith.constant 0 : index
    %c0_6 = arith.constant 0 : index
    %4 = vector.load %arg7[%c0_5, %c0_6] : memref<1x128xf32, #tpu.memory_space<vmem>>, vector<1x128xf32>
    %c0_7 = arith.constant 0 : index
    %c0_8 = arith.constant 0 : index
    %c0_9 = arith.constant 0 : index
    %5 = vector.load %arg6[%c0_7, %c0_8, %c0_9] : memref<4x32x128xf32, #tpu.memory_space<vmem>>, vector<1x32x128xf32>
    %6 = vector.shape_cast %5 : vector<1x32x128xf32> to vector<32x128xf32>
    %cst_10 = arith.constant dense<0.000000e+00> : vector<2x128xf32>
    %7 = tpu.matmul %3, %6, %cst_10 {dimension_numbers = #tpu.dot_dimension_numbers<[1], [0], [0], [1], [0, 0, 1, 1], [], []>} : vector<2x32xf32>, vector<32x128xf32>, vector<2x128xf32> -> vector<2x128xf32>
    %8 = vector.broadcast %4 : vector<1x128xf32> to vector<2x128xf32>
    %9 = arith.addf %8, %7 : vector<2x128xf32>
    %c0_11 = arith.constant 0 : index
    %c0_12 = arith.constant 0 : index
    %c0_13 = arith.constant 0 : index
    %c0_14 = arith.constant 0 : index
    %10 = vector.load %arg4[%c0_11, %c0_12, %c0_13, %c0_14] : memref<3x5x32x32xf32, #tpu.memory_space<vmem>>, vector<1x5x32x32xf32>
    %11 = vector.shape_cast %10 : vector<1x5x32x32xf32> to vector<5x32x32xf32>
    %c0_15 = arith.constant 0 : index
    %c0_16 = arith.constant 0 : index
    %c0_17 = arith.constant 0 : index
    %12 = vector.load %arg5[%c0_15, %c0_16, %c0_17] : memref<3x8x32xf32, #tpu.memory_space<vmem>>, vector<1x8x32xf32>
    %13 = vector.shape_cast %12 : vector<1x8x32xf32> to vector<8x32xf32>
    %cst_18 = arith.constant dense<0.000000e+00> : vector<32x32xf32>
    %14 = tpu.matmul %0, %2, %cst_18 {dimension_numbers = #tpu.dot_dimension_numbers<[1], [0], [0], [1], [0, 0, 1, 1], [], []>} : vector<32x32xf32>, vector<32x32xf32>, vector<32x32xf32> -> vector<32x32xf32>
    %15 = vector.extract_strided_slice %11 {offsets = [0, 0, 0], sizes = [1, 32, 32], strides = [1, 1, 1]} : vector<5x32x32xf32> to vector<1x32x32xf32>
    %16 = vector.shape_cast %15 : vector<1x32x32xf32> to vector<32x32xf32>
    %cst_19 = arith.constant dense<0.000000e+00> : vector<32x32xf32>
    %17 = tpu.matmul %14, %16, %cst_19 {dimension_numbers = #tpu.dot_dimension_numbers<[1], [0], [0], [1], [0, 0, 1, 1], [], []>} : vector<32x32xf32>, vector<32x32xf32>, vector<32x32xf32> -> vector<32x32xf32>
    %18 = vector.extract_strided_slice %13 {offsets = [0, 0], sizes = [1, 32], strides = [1, 1]} : vector<8x32xf32> to vector<1x32xf32>
    %19 = vector.broadcast %18 : vector<1x32xf32> to vector<32x32xf32>
    %20 = arith.addf %17, %19 : vector<32x32xf32>
    %cst_20 = arith.constant 0.000000e+00 : f32
    %21 = vector.broadcast %cst_20 : f32 to vector<32x32xf32>
    %22 = arith.maximumf %20, %21 : vector<32x32xf32>
    %23 = vector.extract_strided_slice %11 {offsets = [1, 0, 0], sizes = [1, 32, 32], strides = [1, 1, 1]} : vector<5x32x32xf32> to vector<1x32x32xf32>
    %24 = vector.shape_cast %23 : vector<1x32x32xf32> to vector<32x32xf32>
    %cst_21 = arith.constant dense<0.000000e+00> : vector<32x32xf32>
    %25 = tpu.matmul %22, %24, %cst_21 {dimension_numbers = #tpu.dot_dimension_numbers<[1], [0], [0], [1], [0, 0, 1, 1], [], []>} : vector<32x32xf32>, vector<32x32xf32>, vector<32x32xf32> -> vector<32x32xf32>
    %26 = vector.extract_strided_slice %13 {offsets = [1, 0], sizes = [1, 32], strides = [1, 1]} : vector<8x32xf32> to vector<1x32xf32>
    %27 = vector.broadcast %26 : vector<1x32xf32> to vector<32x32xf32>
    %28 = arith.addf %25, %27 : vector<32x32xf32>
    %cst_22 = arith.constant 0.000000e+00 : f32
    %29 = vector.broadcast %cst_22 : f32 to vector<32x32xf32>
    %30 = arith.maximumf %28, %29 : vector<32x32xf32>
    %31 = vector.extract_strided_slice %11 {offsets = [2, 0, 0], sizes = [1, 32, 32], strides = [1, 1, 1]} : vector<5x32x32xf32> to vector<1x32x32xf32>
    %32 = vector.shape_cast %31 : vector<1x32x32xf32> to vector<32x32xf32>
    %cst_23 = arith.constant dense<0.000000e+00> : vector<32x32xf32>
    %33 = tpu.matmul %30, %32, %cst_23 {dimension_numbers = #tpu.dot_dimension_numbers<[1], [0], [0], [1], [0, 0, 1, 1], [], []>} : vector<32x32xf32>, vector<32x32xf32>, vector<32x32xf32> -> vector<32x32xf32>
    %34 = vector.extract_strided_slice %13 {offsets = [2, 0], sizes = [1, 32], strides = [1, 1]} : vector<8x32xf32> to vector<1x32xf32>
    %35 = vector.broadcast %34 : vector<1x32xf32> to vector<32x32xf32>
    %36 = arith.addf %33, %35 : vector<32x32xf32>
    %cst_24 = arith.constant 0.000000e+00 : f32
    %37 = vector.broadcast %cst_24 : f32 to vector<32x32xf32>
    %38 = arith.maximumf %36, %37 : vector<32x32xf32>
    %39 = vector.extract_strided_slice %11 {offsets = [3, 0, 0], sizes = [1, 32, 32], strides = [1, 1, 1]} : vector<5x32x32xf32> to vector<1x32x32xf32>
    %40 = vector.shape_cast %39 : vector<1x32x32xf32> to vector<32x32xf32>
    %cst_25 = arith.constant dense<0.000000e+00> : vector<32x32xf32>
    %41 = tpu.matmul %38, %40, %cst_25 {dimension_numbers = #tpu.dot_dimension_numbers<[1], [0], [0], [1], [0, 0, 1, 1], [], []>} : vector<32x32xf32>, vector<32x32xf32>, vector<32x32xf32> -> vector<32x32xf32>
    %42 = vector.extract_strided_slice %13 {offsets = [3, 0], sizes = [1, 32], strides = [1, 1]} : vector<8x32xf32> to vector<1x32xf32>
    %43 = vector.broadcast %42 : vector<1x32xf32> to vector<32x32xf32>
    %44 = arith.addf %41, %43 : vector<32x32xf32>
    %cst_26 = arith.constant 0.000000e+00 : f32
    %45 = vector.broadcast %cst_26 : f32 to vector<32x32xf32>
    %46 = arith.maximumf %44, %45 : vector<32x32xf32>
    %47 = vector.extract_strided_slice %11 {offsets = [4, 0, 0], sizes = [1, 32, 32], strides = [1, 1, 1]} : vector<5x32x32xf32> to vector<1x32x32xf32>
    %48 = vector.shape_cast %47 : vector<1x32x32xf32> to vector<32x32xf32>
    %cst_27 = arith.constant dense<0.000000e+00> : vector<32x32xf32>
    %49 = tpu.matmul %46, %48, %cst_27 {dimension_numbers = #tpu.dot_dimension_numbers<[1], [0], [0], [1], [0, 0, 1, 1], [], []>} : vector<32x32xf32>, vector<32x32xf32>, vector<32x32xf32> -> vector<32x32xf32>
    %50 = vector.extract_strided_slice %13 {offsets = [4, 0], sizes = [1, 32], strides = [1, 1]} : vector<8x32xf32> to vector<1x32xf32>
    %51 = vector.broadcast %50 : vector<1x32xf32> to vector<32x32xf32>
    %52 = arith.addf %49, %51 : vector<32x32xf32>
    %cst_28 = arith.constant 0.000000e+00 : f32
    %53 = vector.broadcast %cst_28 : f32 to vector<32x32xf32>
    %54 = arith.maximumf %52, %53 : vector<32x32xf32>
    %55 = vector.extract_strided_slice %13 {offsets = [5, 0], sizes = [1, 32], strides = [1, 1]} : vector<8x32xf32> to vector<1x32xf32>
    %56 = vector.broadcast %55 : vector<1x32xf32> to vector<32x32xf32>
    %57 = arith.mulf %54, %56 : vector<32x32xf32>
    %58 = vector.extract_strided_slice %13 {offsets = [6, 0], sizes = [1, 32], strides = [1, 1]} : vector<8x32xf32> to vector<1x32xf32>
    %59 = vector.broadcast %58 : vector<1x32xf32> to vector<32x32xf32>
    %60 = arith.addf %57, %59 : vector<32x32xf32>
    %cst_29 = arith.constant 0.000000e+00 : f32
    %61 = vector.broadcast %cst_29 : f32 to vector<32x32xf32>
    %62 = arith.maximumf %60, %61 : vector<32x32xf32>
    %cst_30 = arith.constant dense<0.000000e+00> : vector<2x32xf32>
    %63 = tpu.matmul %1, %62, %cst_30 {dimension_numbers = #tpu.dot_dimension_numbers<[1], [0], [0], [1], [0, 0, 1, 1], [], []>} : vector<2x32xf32>, vector<32x32xf32>, vector<2x32xf32> -> vector<2x32xf32>
    %c1 = arith.constant 1 : index
    %c0_31 = arith.constant 0 : index
    %c0_32 = arith.constant 0 : index
    %64 = vector.load %arg6[%c1, %c0_31, %c0_32] : memref<4x32x128xf32, #tpu.memory_space<vmem>>, vector<1x32x128xf32>
    %65 = vector.shape_cast %64 : vector<1x32x128xf32> to vector<32x128xf32>
    %cst_33 = arith.constant dense<0.000000e+00> : vector<2x128xf32>
    %66 = tpu.matmul %63, %65, %cst_33 {dimension_numbers = #tpu.dot_dimension_numbers<[1], [0], [0], [1], [0, 0, 1, 1], [], []>} : vector<2x32xf32>, vector<32x128xf32>, vector<2x128xf32> -> vector<2x128xf32>
    %67 = arith.addf %9, %66 : vector<2x128xf32>
    %c1_34 = arith.constant 1 : index
    %c0_35 = arith.constant 0 : index
    %c0_36 = arith.constant 0 : index
    %c0_37 = arith.constant 0 : index
    %68 = vector.load %arg4[%c1_34, %c0_35, %c0_36, %c0_37] : memref<3x5x32x32xf32, #tpu.memory_space<vmem>>, vector<1x5x32x32xf32>
    %69 = vector.shape_cast %68 : vector<1x5x32x32xf32> to vector<5x32x32xf32>
    %c1_38 = arith.constant 1 : index
    %c0_39 = arith.constant 0 : index
    %c0_40 = arith.constant 0 : index
    %70 = vector.load %arg5[%c1_38, %c0_39, %c0_40] : memref<3x8x32xf32, #tpu.memory_space<vmem>>, vector<1x8x32xf32>
    %71 = vector.shape_cast %70 : vector<1x8x32xf32> to vector<8x32xf32>
    %cst_41 = arith.constant dense<0.000000e+00> : vector<32x32xf32>
    %72 = tpu.matmul %0, %62, %cst_41 {dimension_numbers = #tpu.dot_dimension_numbers<[1], [0], [0], [1], [0, 0, 1, 1], [], []>} : vector<32x32xf32>, vector<32x32xf32>, vector<32x32xf32> -> vector<32x32xf32>
    %73 = vector.extract_strided_slice %69 {offsets = [0, 0, 0], sizes = [1, 32, 32], strides = [1, 1, 1]} : vector<5x32x32xf32> to vector<1x32x32xf32>
    %74 = vector.shape_cast %73 : vector<1x32x32xf32> to vector<32x32xf32>
    %cst_42 = arith.constant dense<0.000000e+00> : vector<32x32xf32>
    %75 = tpu.matmul %72, %74, %cst_42 {dimension_numbers = #tpu.dot_dimension_numbers<[1], [0], [0], [1], [0, 0, 1, 1], [], []>} : vector<32x32xf32>, vector<32x32xf32>, vector<32x32xf32> -> vector<32x32xf32>
    %76 = vector.extract_strided_slice %71 {offsets = [0, 0], sizes = [1, 32], strides = [1, 1]} : vector<8x32xf32> to vector<1x32xf32>
    %77 = vector.broadcast %76 : vector<1x32xf32> to vector<32x32xf32>
    %78 = arith.addf %75, %77 : vector<32x32xf32>
    %cst_43 = arith.constant 0.000000e+00 : f32
    %79 = vector.broadcast %cst_43 : f32 to vector<32x32xf32>
    %80 = arith.maximumf %78, %79 : vector<32x32xf32>
    %81 = vector.extract_strided_slice %69 {offsets = [1, 0, 0], sizes = [1, 32, 32], strides = [1, 1, 1]} : vector<5x32x32xf32> to vector<1x32x32xf32>
    %82 = vector.shape_cast %81 : vector<1x32x32xf32> to vector<32x32xf32>
    %cst_44 = arith.constant dense<0.000000e+00> : vector<32x32xf32>
    %83 = tpu.matmul %80, %82, %cst_44 {dimension_numbers = #tpu.dot_dimension_numbers<[1], [0], [0], [1], [0, 0, 1, 1], [], []>} : vector<32x32xf32>, vector<32x32xf32>, vector<32x32xf32> -> vector<32x32xf32>
    %84 = vector.extract_strided_slice %71 {offsets = [1, 0], sizes = [1, 32], strides = [1, 1]} : vector<8x32xf32> to vector<1x32xf32>
    %85 = vector.broadcast %84 : vector<1x32xf32> to vector<32x32xf32>
    %86 = arith.addf %83, %85 : vector<32x32xf32>
    %cst_45 = arith.constant 0.000000e+00 : f32
    %87 = vector.broadcast %cst_45 : f32 to vector<32x32xf32>
    %88 = arith.maximumf %86, %87 : vector<32x32xf32>
    %89 = vector.extract_strided_slice %69 {offsets = [2, 0, 0], sizes = [1, 32, 32], strides = [1, 1, 1]} : vector<5x32x32xf32> to vector<1x32x32xf32>
    %90 = vector.shape_cast %89 : vector<1x32x32xf32> to vector<32x32xf32>
    %cst_46 = arith.constant dense<0.000000e+00> : vector<32x32xf32>
    %91 = tpu.matmul %88, %90, %cst_46 {dimension_numbers = #tpu.dot_dimension_numbers<[1], [0], [0], [1], [0, 0, 1, 1], [], []>} : vector<32x32xf32>, vector<32x32xf32>, vector<32x32xf32> -> vector<32x32xf32>
    %92 = vector.extract_strided_slice %71 {offsets = [2, 0], sizes = [1, 32], strides = [1, 1]} : vector<8x32xf32> to vector<1x32xf32>
    %93 = vector.broadcast %92 : vector<1x32xf32> to vector<32x32xf32>
    %94 = arith.addf %91, %93 : vector<32x32xf32>
    %cst_47 = arith.constant 0.000000e+00 : f32
    %95 = vector.broadcast %cst_47 : f32 to vector<32x32xf32>
    %96 = arith.maximumf %94, %95 : vector<32x32xf32>
    %97 = vector.extract_strided_slice %69 {offsets = [3, 0, 0], sizes = [1, 32, 32], strides = [1, 1, 1]} : vector<5x32x32xf32> to vector<1x32x32xf32>
    %98 = vector.shape_cast %97 : vector<1x32x32xf32> to vector<32x32xf32>
    %cst_48 = arith.constant dense<0.000000e+00> : vector<32x32xf32>
    %99 = tpu.matmul %96, %98, %cst_48 {dimension_numbers = #tpu.dot_dimension_numbers<[1], [0], [0], [1], [0, 0, 1, 1], [], []>} : vector<32x32xf32>, vector<32x32xf32>, vector<32x32xf32> -> vector<32x32xf32>
    %100 = vector.extract_strided_slice %71 {offsets = [3, 0], sizes = [1, 32], strides = [1, 1]} : vector<8x32xf32> to vector<1x32xf32>
    %101 = vector.broadcast %100 : vector<1x32xf32> to vector<32x32xf32>
    %102 = arith.addf %99, %101 : vector<32x32xf32>
    %cst_49 = arith.constant 0.000000e+00 : f32
    %103 = vector.broadcast %cst_49 : f32 to vector<32x32xf32>
    %104 = arith.maximumf %102, %103 : vector<32x32xf32>
    %105 = vector.extract_strided_slice %69 {offsets = [4, 0, 0], sizes = [1, 32, 32], strides = [1, 1, 1]} : vector<5x32x32xf32> to vector<1x32x32xf32>
    %106 = vector.shape_cast %105 : vector<1x32x32xf32> to vector<32x32xf32>
    %cst_50 = arith.constant dense<0.000000e+00> : vector<32x32xf32>
    %107 = tpu.matmul %104, %106, %cst_50 {dimension_numbers = #tpu.dot_dimension_numbers<[1], [0], [0], [1], [0, 0, 1, 1], [], []>} : vector<32x32xf32>, vector<32x32xf32>, vector<32x32xf32> -> vector<32x32xf32>
    %108 = vector.extract_strided_slice %71 {offsets = [4, 0], sizes = [1, 32], strides = [1, 1]} : vector<8x32xf32> to vector<1x32xf32>
    %109 = vector.broadcast %108 : vector<1x32xf32> to vector<32x32xf32>
    %110 = arith.addf %107, %109 : vector<32x32xf32>
    %cst_51 = arith.constant 0.000000e+00 : f32
    %111 = vector.broadcast %cst_51 : f32 to vector<32x32xf32>
    %112 = arith.maximumf %110, %111 : vector<32x32xf32>
    %113 = vector.extract_strided_slice %71 {offsets = [5, 0], sizes = [1, 32], strides = [1, 1]} : vector<8x32xf32> to vector<1x32xf32>
    %114 = vector.broadcast %113 : vector<1x32xf32> to vector<32x32xf32>
    %115 = arith.mulf %112, %114 : vector<32x32xf32>
    %116 = vector.extract_strided_slice %71 {offsets = [6, 0], sizes = [1, 32], strides = [1, 1]} : vector<8x32xf32> to vector<1x32xf32>
    %117 = vector.broadcast %116 : vector<1x32xf32> to vector<32x32xf32>
    %118 = arith.addf %115, %117 : vector<32x32xf32>
    %cst_52 = arith.constant 0.000000e+00 : f32
    %119 = vector.broadcast %cst_52 : f32 to vector<32x32xf32>
    %120 = arith.maximumf %118, %119 : vector<32x32xf32>
    %cst_53 = arith.constant dense<0.000000e+00> : vector<2x32xf32>
    %121 = tpu.matmul %1, %120, %cst_53 {dimension_numbers = #tpu.dot_dimension_numbers<[1], [0], [0], [1], [0, 0, 1, 1], [], []>} : vector<2x32xf32>, vector<32x32xf32>, vector<2x32xf32> -> vector<2x32xf32>
    %c2 = arith.constant 2 : index
    %c0_54 = arith.constant 0 : index
    %c0_55 = arith.constant 0 : index
    %122 = vector.load %arg6[%c2, %c0_54, %c0_55] : memref<4x32x128xf32, #tpu.memory_space<vmem>>, vector<1x32x128xf32>
    %123 = vector.shape_cast %122 : vector<1x32x128xf32> to vector<32x128xf32>
    %cst_56 = arith.constant dense<0.000000e+00> : vector<2x128xf32>
    %124 = tpu.matmul %121, %123, %cst_56 {dimension_numbers = #tpu.dot_dimension_numbers<[1], [0], [0], [1], [0, 0, 1, 1], [], []>} : vector<2x32xf32>, vector<32x128xf32>, vector<2x128xf32> -> vector<2x128xf32>
    %125 = arith.addf %67, %124 : vector<2x128xf32>
    %c2_57 = arith.constant 2 : index
    %c0_58 = arith.constant 0 : index
    %c0_59 = arith.constant 0 : index
    %c0_60 = arith.constant 0 : index
    %126 = vector.load %arg4[%c2_57, %c0_58, %c0_59, %c0_60] : memref<3x5x32x32xf32, #tpu.memory_space<vmem>>, vector<1x5x32x32xf32>
    %127 = vector.shape_cast %126 : vector<1x5x32x32xf32> to vector<5x32x32xf32>
    %c2_61 = arith.constant 2 : index
    %c0_62 = arith.constant 0 : index
    %c0_63 = arith.constant 0 : index
    %128 = vector.load %arg5[%c2_61, %c0_62, %c0_63] : memref<3x8x32xf32, #tpu.memory_space<vmem>>, vector<1x8x32xf32>
    %129 = vector.shape_cast %128 : vector<1x8x32xf32> to vector<8x32xf32>
    %cst_64 = arith.constant dense<0.000000e+00> : vector<32x32xf32>
    %130 = tpu.matmul %0, %120, %cst_64 {dimension_numbers = #tpu.dot_dimension_numbers<[1], [0], [0], [1], [0, 0, 1, 1], [], []>} : vector<32x32xf32>, vector<32x32xf32>, vector<32x32xf32> -> vector<32x32xf32>
    %131 = vector.extract_strided_slice %127 {offsets = [0, 0, 0], sizes = [1, 32, 32], strides = [1, 1, 1]} : vector<5x32x32xf32> to vector<1x32x32xf32>
    %132 = vector.shape_cast %131 : vector<1x32x32xf32> to vector<32x32xf32>
    %cst_65 = arith.constant dense<0.000000e+00> : vector<32x32xf32>
    %133 = tpu.matmul %130, %132, %cst_65 {dimension_numbers = #tpu.dot_dimension_numbers<[1], [0], [0], [1], [0, 0, 1, 1], [], []>} : vector<32x32xf32>, vector<32x32xf32>, vector<32x32xf32> -> vector<32x32xf32>
    %134 = vector.extract_strided_slice %129 {offsets = [0, 0], sizes = [1, 32], strides = [1, 1]} : vector<8x32xf32> to vector<1x32xf32>
    %135 = vector.broadcast %134 : vector<1x32xf32> to vector<32x32xf32>
    %136 = arith.addf %133, %135 : vector<32x32xf32>
    %cst_66 = arith.constant 0.000000e+00 : f32
    %137 = vector.broadcast %cst_66 : f32 to vector<32x32xf32>
    %138 = arith.maximumf %136, %137 : vector<32x32xf32>
    %139 = vector.extract_strided_slice %127 {offsets = [1, 0, 0], sizes = [1, 32, 32], strides = [1, 1, 1]} : vector<5x32x32xf32> to vector<1x32x32xf32>
    %140 = vector.shape_cast %139 : vector<1x32x32xf32> to vector<32x32xf32>
    %cst_67 = arith.constant dense<0.000000e+00> : vector<32x32xf32>
    %141 = tpu.matmul %138, %140, %cst_67 {dimension_numbers = #tpu.dot_dimension_numbers<[1], [0], [0], [1], [0, 0, 1, 1], [], []>} : vector<32x32xf32>, vector<32x32xf32>, vector<32x32xf32> -> vector<32x32xf32>
    %142 = vector.extract_strided_slice %129 {offsets = [1, 0], sizes = [1, 32], strides = [1, 1]} : vector<8x32xf32> to vector<1x32xf32>
    %143 = vector.broadcast %142 : vector<1x32xf32> to vector<32x32xf32>
    %144 = arith.addf %141, %143 : vector<32x32xf32>
    %cst_68 = arith.constant 0.000000e+00 : f32
    %145 = vector.broadcast %cst_68 : f32 to vector<32x32xf32>
    %146 = arith.maximumf %144, %145 : vector<32x32xf32>
    %147 = vector.extract_strided_slice %127 {offsets = [2, 0, 0], sizes = [1, 32, 32], strides = [1, 1, 1]} : vector<5x32x32xf32> to vector<1x32x32xf32>
    %148 = vector.shape_cast %147 : vector<1x32x32xf32> to vector<32x32xf32>
    %cst_69 = arith.constant dense<0.000000e+00> : vector<32x32xf32>
    %149 = tpu.matmul %146, %148, %cst_69 {dimension_numbers = #tpu.dot_dimension_numbers<[1], [0], [0], [1], [0, 0, 1, 1], [], []>} : vector<32x32xf32>, vector<32x32xf32>, vector<32x32xf32> -> vector<32x32xf32>
    %150 = vector.extract_strided_slice %129 {offsets = [2, 0], sizes = [1, 32], strides = [1, 1]} : vector<8x32xf32> to vector<1x32xf32>
    %151 = vector.broadcast %150 : vector<1x32xf32> to vector<32x32xf32>
    %152 = arith.addf %149, %151 : vector<32x32xf32>
    %cst_70 = arith.constant 0.000000e+00 : f32
    %153 = vector.broadcast %cst_70 : f32 to vector<32x32xf32>
    %154 = arith.maximumf %152, %153 : vector<32x32xf32>
    %155 = vector.extract_strided_slice %127 {offsets = [3, 0, 0], sizes = [1, 32, 32], strides = [1, 1, 1]} : vector<5x32x32xf32> to vector<1x32x32xf32>
    %156 = vector.shape_cast %155 : vector<1x32x32xf32> to vector<32x32xf32>
    %cst_71 = arith.constant dense<0.000000e+00> : vector<32x32xf32>
    %157 = tpu.matmul %154, %156, %cst_71 {dimension_numbers = #tpu.dot_dimension_numbers<[1], [0], [0], [1], [0, 0, 1, 1], [], []>} : vector<32x32xf32>, vector<32x32xf32>, vector<32x32xf32> -> vector<32x32xf32>
    %158 = vector.extract_strided_slice %129 {offsets = [3, 0], sizes = [1, 32], strides = [1, 1]} : vector<8x32xf32> to vector<1x32xf32>
    %159 = vector.broadcast %158 : vector<1x32xf32> to vector<32x32xf32>
    %160 = arith.addf %157, %159 : vector<32x32xf32>
    %cst_72 = arith.constant 0.000000e+00 : f32
    %161 = vector.broadcast %cst_72 : f32 to vector<32x32xf32>
    %162 = arith.maximumf %160, %161 : vector<32x32xf32>
    %163 = vector.extract_strided_slice %127 {offsets = [4, 0, 0], sizes = [1, 32, 32], strides = [1, 1, 1]} : vector<5x32x32xf32> to vector<1x32x32xf32>
    %164 = vector.shape_cast %163 : vector<1x32x32xf32> to vector<32x32xf32>
    %cst_73 = arith.constant dense<0.000000e+00> : vector<32x32xf32>
    %165 = tpu.matmul %162, %164, %cst_73 {dimension_numbers = #tpu.dot_dimension_numbers<[1], [0], [0], [1], [0, 0, 1, 1], [], []>} : vector<32x32xf32>, vector<32x32xf32>, vector<32x32xf32> -> vector<32x32xf32>
    %166 = vector.extract_strided_slice %129 {offsets = [4, 0], sizes = [1, 32], strides = [1, 1]} : vector<8x32xf32> to vector<1x32xf32>
    %167 = vector.broadcast %166 : vector<1x32xf32> to vector<32x32xf32>
    %168 = arith.addf %165, %167 : vector<32x32xf32>
    %cst_74 = arith.constant 0.000000e+00 : f32
    %169 = vector.broadcast %cst_74 : f32 to vector<32x32xf32>
    %170 = arith.maximumf %168, %169 : vector<32x32xf32>
    %171 = vector.extract_strided_slice %129 {offsets = [5, 0], sizes = [1, 32], strides = [1, 1]} : vector<8x32xf32> to vector<1x32xf32>
    %172 = vector.broadcast %171 : vector<1x32xf32> to vector<32x32xf32>
    %173 = arith.mulf %170, %172 : vector<32x32xf32>
    %174 = vector.extract_strided_slice %129 {offsets = [6, 0], sizes = [1, 32], strides = [1, 1]} : vector<8x32xf32> to vector<1x32xf32>
    %175 = vector.broadcast %174 : vector<1x32xf32> to vector<32x32xf32>
    %176 = arith.addf %173, %175 : vector<32x32xf32>
    %cst_75 = arith.constant 0.000000e+00 : f32
    %177 = vector.broadcast %cst_75 : f32 to vector<32x32xf32>
    %178 = arith.maximumf %176, %177 : vector<32x32xf32>
    %cst_76 = arith.constant dense<0.000000e+00> : vector<2x32xf32>
    %179 = tpu.matmul %1, %178, %cst_76 {dimension_numbers = #tpu.dot_dimension_numbers<[1], [0], [0], [1], [0, 0, 1, 1], [], []>} : vector<2x32xf32>, vector<32x32xf32>, vector<2x32xf32> -> vector<2x32xf32>
    %c3 = arith.constant 3 : index
    %c0_77 = arith.constant 0 : index
    %c0_78 = arith.constant 0 : index
    %180 = vector.load %arg6[%c3, %c0_77, %c0_78] : memref<4x32x128xf32, #tpu.memory_space<vmem>>, vector<1x32x128xf32>
    %181 = vector.shape_cast %180 : vector<1x32x128xf32> to vector<32x128xf32>
    %cst_79 = arith.constant dense<0.000000e+00> : vector<2x128xf32>
    %182 = tpu.matmul %179, %181, %cst_79 {dimension_numbers = #tpu.dot_dimension_numbers<[1], [0], [0], [1], [0, 0, 1, 1], [], []>} : vector<2x32xf32>, vector<32x128xf32>, vector<2x128xf32> -> vector<2x128xf32>
    %183 = arith.addf %125, %182 : vector<2x128xf32>
    %c0_80 = arith.constant 0 : index
    %c0_81 = arith.constant 0 : index
    %184 = vector.load %arg8[%c0_80, %c0_81] : memref<2x128xf32, #tpu.memory_space<vmem>>, vector<2x128xf32>
    tpu.vector_store %arg8[%c0_80, %c0_81], %183 {strides = array<i32>} : memref<2x128xf32, #tpu.memory_space<vmem>>, vector<2x128xf32>,
    return
  }
  func.func @transform_0(%arg0: i32) -> (i32, i32) {
    %c0_i32 = arith.constant 0 : i32
    %c0_i32_0 = arith.constant 0 : i32
    %c0_i32_1 = arith.constant 0 : i32
    return %c0_i32, %c0_i32_0 : i32, i32
  }
  func.func @transform_1(%arg0: i32) -> (i32, i32) {
    %c0_i32 = arith.constant 0 : i32
    %c0_i32_0 = arith.constant 0 : i32
    %c0_i32_1 = arith.constant 0 : i32
    return %c0_i32, %c0_i32_0 : i32, i32
  }
  func.func @transform_2(%arg0: i32) -> (i32, i32) {
    %c0_i32 = arith.constant 0 : i32
    %c0_i32_0 = arith.constant 0 : i32
    %c0_i32_1 = arith.constant 0 : i32
    return %c0_i32, %c0_i32_0 : i32, i32
  }
  func.func @transform_3(%arg0: i32) -> (i32, i32, i32, i32) {
    %c0_i32 = arith.constant 0 : i32
    %c0_i32_0 = arith.constant 0 : i32
    %c0_i32_1 = arith.constant 0 : i32
    %c0_i32_2 = arith.constant 0 : i32
    %c0_i32_3 = arith.constant 0 : i32
    return %c0_i32, %c0_i32_0, %c0_i32_1, %c0_i32_2 : i32, i32, i32, i32
  }
  func.func @transform_4(%arg0: i32) -> (i32, i32, i32) {
    %c0_i32 = arith.constant 0 : i32
    %c0_i32_0 = arith.constant 0 : i32
    %c0_i32_1 = arith.constant 0 : i32
    %c0_i32_2 = arith.constant 0 : i32
    return %c0_i32, %c0_i32_0, %c0_i32_1 : i32, i32, i32
  }
  func.func @transform_5(%arg0: i32) -> (i32, i32, i32) {
    %c0_i32 = arith.constant 0 : i32
    %c0_i32_0 = arith.constant 0 : i32
    %c0_i32_1 = arith.constant 0 : i32
    %c0_i32_2 = arith.constant 0 : i32
    return %c0_i32, %c0_i32_0, %c0_i32_1 : i32, i32, i32
  }
  func.func @transform_6(%arg0: i32) -> (i32, i32) {
    %c0_i32 = arith.constant 0 : i32
    %c0_i32_0 = arith.constant 0 : i32
    %c0_i32_1 = arith.constant 0 : i32
    return %c0_i32, %c0_i32_0 : i32, i32
  }
  func.func @transform_7(%arg0: i32) -> (i32, i32) {
    %c0_i32 = arith.constant 0 : i32
    %c0_i32_0 = arith.constant 0 : i32
    %c0_i32_1 = arith.constant 0 : i32
    return %c0_i32, %c0_i32_0 : i32, i32
  }
}

</mosaic_0001>

<llo_original>
// kernel: gin_forward.1
$region0: #{gin_forward.1}
  #allocation0 [shape = 'u32[]', space=smem, size = 0x4, offset = 0x4, fixed_abs, tag = 'smem constant byte address 0x4 - core index']
  #allocation1 [shape = 'u32[72,128]{1,0:T(1,128)}', space=vmem, size = 0x9000, scoped, tag = 'internal scratch']
  %s0 = inlined_call_operand.vmem [shape: f32[32,32], index: 0, kind: input, shape index: {}]
  %s1 = inlined_call_operand.vmem [shape: f32[2,32], index: 1, kind: input, shape index: {}]
  %s2 = inlined_call_operand.vmem [shape: f32[32,32], index: 2, kind: input, shape index: {}]
  %s3 = inlined_call_operand.hbm [shape: f32[3,5,32,32], index: 3, kind: input, shape index: {}]
  %s4 = inlined_call_operand.vmem [shape: f32[3,8,32], index: 4, kind: input, shape index: {}]
  %s5 = inlined_call_operand.vmem [shape: f32[4,32,128], index: 5, kind: input, shape index: {}]
  %s6 = inlined_call_operand.vmem [shape: f32[1,128], index: 6, kind: input, shape index: {}]
  %s7 = inlined_call_operand.hbm [shape: f32[2,128], index: 7, kind: output, shape index: {}]
  %s8 = sld [smem:[#allocation0]]
  $region42: #{gin_forward.1} parent=0
    _
  %s10 = ssub.s32 1, %s8
  %s11 = scalar_select 0, %s10, %s8
  $region1: #{gin_forward.1} parent=0
    #allocation2 [shape = 'u8[245760]{0}', space=vmem, size = 0x3c000, scoped, tag = 'input window, operand 3, single buffered']
    #allocation3 [shape = 's32[1]{0}', space=sflag, size = 0x4, scoped, tag = 'scoped memory for gin_forward.1']
    #allocation4 [shape = 's32[1]{0}', space=sflag, size = 0x4, scoped, tag = 'scoped memory for gin_forward.1']
    #allocation5 [shape = 'u8[1024]{0}', space=vmem, size = 0x400, scoped, tag = 'output window, operand 0, single buffered']
    %12 = vsyncpa [#allocation3], 0
    %13 = vsyncpa [#allocation4], 0
    // Predicated region
    $region2: #{gin_forward.1} parent=1 // pred_check
      _
    $region3: #{gin_forward.1} parent=1 // pred_check_branch
      %15 = sbr.rel (0) target = $region5
    $region4: #{gin_forward.1} parent=1 // pred_region
      _
    $region5: #{gin_forward.1} parent=1 // pred_fallthru
      _
    // Predicated region
    $region6: #{gin_forward.1} parent=1 // pred_check
      _
    $region7: #{gin_forward.1} parent=1 // pred_check_branch
      %17 = sbr.rel (0) target = $region9
    $region8: #{gin_forward.1} parent=1 // pred_region
      _
    $region9: #{gin_forward.1} parent=1 // pred_fallthru
      _
    // Predicated region
    $region10: #{gin_forward.1} parent=1 // pred_check
      _
    $region11: #{gin_forward.1} parent=1 // pred_check_branch
      %19 = sbr.rel (0) target = $region13
    $region12: #{gin_forward.1} parent=1 // pred_region
      _
    $region13: #{gin_forward.1} parent=1 // pred_fallthru
      _
    // Predicated region
    $region14: #{gin_forward.1} parent=1 // pred_check
      _
    $region15: #{gin_forward.1} parent=1 // pred_check_branch
      %21 = sbr.rel (0) target = $region17
    $region16: #{gin_forward.1} parent=1 // pred_region
      %23 = vsyncadd [#allocation3], 0
      %s24 = sshll.u32 %s3, 4
      %s25 = int_to_ptr.hbm [resolvable:$true] %s24
      %s26 = sshll.u32 [#allocation2], 4
      %s27 = int_to_ptr.vmem [resolvable:$true] %s26
      %32 = dma.hbm_to_vmem [thread:$0]  %s25, 7680, %s27, [#allocation3], 128, 128, 8
    $region17: #{gin_forward.1} parent=1 // pred_fallthru
      _
    // Predicated region
    $region18: #{gin_forward.1} parent=1 // pred_check
      _
    $region19: #{gin_forward.1} parent=1 // pred_check_branch
      %34 = sbr.rel (0) target = $region21
    $region20: #{gin_forward.1} parent=1 // pred_region
      _
    $region21: #{gin_forward.1} parent=1 // pred_fallthru
      _
    // Predicated region
    $region22: #{gin_forward.1} parent=1 // pred_check
      _
    $region23: #{gin_forward.1} parent=1 // pred_check_branch
      %36 = sbr.rel (0) target = $region25
    $region24: #{gin_forward.1} parent=1 // pred_region
      _
    $region25: #{gin_forward.1} parent=1 // pred_fallthru
      _
    // Predicated region
    $region26: #{gin_forward.1} parent=1 // pred_check
      _
    $region27: #{gin_forward.1} parent=1 // pred_check_branch
      %38 = sbr.rel (0) target = $region29
    $region28: #{gin_forward.1} parent=1 // pred_region
      _
    $region29: #{gin_forward.1} parent=1 // pred_fallthru
      _
    // Predicated region
    $region30: #{gin_forward.1} parent=1 // pred_check
      _
    $region31: #{gin_forward.1} parent=1 // pred_check_branch
      %40 = sbr.rel (0) target = $region33
    $region32: #{gin_forward.1} parent=1 // pred_region
      %42 = dma.done [#allocation3], 7680
    $region33: #{gin_forward.1} parent=1 // pred_fallthru
      _
    %v43 = vld [vmem:[%s0] sm:$0xff]
    %v44 = vld [vmem:[%s0 + $0x8] sm:$0xff]
    %v45 = vld [vmem:[%s0 + $0x10] sm:$0xff]
    %v46 = vld [vmem:[%s0 + $0x18] sm:$0xff]
    %v47 = vld [vmem:[%s1] sm:$0x3]
    %v48 = vld [vmem:[%s2] sm:$0xff]
    %v49 = vld [vmem:[%s2 + $0x8] sm:$0xff]
    %v50 = vld [vmem:[%s2 + $0x10] sm:$0xff]
    %v51 = vld [vmem:[%s2 + $0x18] sm:$0xff]
    %vm52 = vcmask 261120
    %v54 = vsel %vm52, %v47, 0
    %56 = vmatpush.msra.mxu0 0.0
    %57 = vmatpush.msra.mxu0 0.0
    %58 = vmatpush.msra.mxu0 0.0
    %59 = vmatpush.msra.mxu0 0.0
    %60 = vmatpush.msra.mxu0 0.0
    %61 = vmatpush.msra.mxu0 0.0
    %62 = vmatpush.msra.mxu0 0.0
    %63 = vmatpush.msra.mxu0 0.0
    %64 = vmatpush.msra.mxu0 0.0
    %65 = vmatpush.msra.mxu0 0.0
    %66 = vmatpush.msra.mxu0 0.0
    %67 = vmatpush.msra.mxu0 0.0
    %68 = vmatpush.msra.mxu0 %v51
    %69 = vmatpush.msra.mxu0 %v50
    %70 = vmatpush.msra.mxu0 %v49
    %71 = vmatpush.msra.mxu0 %v48
    %72 = vmatmul.f32.gmra.mxu0 %v54
    %v73 = vpop.f32.mrf.mxu0
    %v74 = vadd.f32 0.0, %v73
    %75 = vdwg.mxu0
    %v76 = vld [vmem:[%s6] sm:$0x1]
    %v77 = vld [vmem:[%s5] sm:$0xff]
    %v78 = vld [vmem:[%s5 + $0x8] sm:$0xff]
    %v79 = vld [vmem:[%s5 + $0x10] sm:$0xff]
    %v80 = vld [vmem:[%s5 + $0x18] sm:$0xff]
    %v82 = vsel %vm52, %v74, 0
    %84 = vmatpush.msra.mxu0 0.0
    %85 = vmatpush.msra.mxu0 0.0
    %86 = vmatpush.msra.mxu0 0.0
    %87 = vmatpush.msra.mxu0 0.0
    %88 = vmatpush.msra.mxu0 0.0
    %89 = vmatpush.msra.mxu0 0.0
    %90 = vmatpush.msra.mxu0 0.0
    %91 = vmatpush.msra.mxu0 0.0
    %92 = vmatpush.msra.mxu0 0.0
    %93 = vmatpush.msra.mxu0 0.0
    %94 = vmatpush.msra.mxu0 0.0
    %95 = vmatpush.msra.mxu0 0.0
    %96 = vmatpush.msra.mxu0 %v80
    %97 = vmatpush.msra.mxu0 %v79
    %98 = vmatpush.msra.mxu0 %v78
    %99 = vmatpush.msra.mxu0 %v77
    %100 = vmatmul.f32.gmra.mxu0 %v82
    %v101 = vpop.f32.mrf.mxu0
    %v102 = vadd.f32 0.0, %v101
    %103 = vdwg.mxu0
    %v105 = vperm.slane %v76, 0
    %v107 = vadd.f32 %v105, %v102
    %v108 = vld [vmem:[#allocation2] sm:$0xff]
    %v109 = vld [vmem:[#allocation2 + $0x8] sm:$0xff]
    %v110 = vld [vmem:[#allocation2 + $0x10] sm:$0xff]
    %v111 = vld [vmem:[#allocation2 + $0x18] sm:$0xff]
    %v112 = vld [vmem:[#allocation2 + $0x20] sm:$0xff]
    %v113 = vld [vmem:[#allocation2 + $0x28] sm:$0xff]
    %v114 = vld [vmem:[#allocation2 + $0x30] sm:$0xff]
    %v115 = vld [vmem:[#allocation2 + $0x38] sm:$0xff]
    %v116 = vld [vmem:[#allocation2 + $0x40] sm:$0xff]
    %v117 = vld [vmem:[#allocation2 + $0x48] sm:$0xff]
    %v118 = vld [vmem:[#allocation2 + $0x50] sm:$0xff]
    %v119 = vld [vmem:[#allocation2 + $0x58] sm:$0xff]
    %v120 = vld [vmem:[#allocation2 + $0x60] sm:$0xff]
    %v121 = vld [vmem:[#allocation2 + $0x68] sm:$0xff]
    %v122 = vld [vmem:[#allocation2 + $0x70] sm:$0xff]
    %v123 = vld [vmem:[#allocation2 + $0x78] sm:$0xff]
    %v124 = vld [vmem:[#allocation2 + $0x80] sm:$0xff]
    %v125 = vld [vmem:[#allocation2 + $0x88] sm:$0xff]
    %v126 = vld [vmem:[#allocation2 + $0x90] sm:$0xff]
    %v127 = vld [vmem:[#allocation2 + $0x98] sm:$0xff]
    %v128 = vld [vmem:[%s4] sm:$0xff]
    %v130 = vsel %vm52, %v43, 0
    %v133 = vsel %vm52, %v44, 0
    %v136 = vsel %vm52, %v45, 0
    %v139 = vsel %vm52, %v46, 0
    %141 = vmatpush.msra.mxu0 0.0
    %142 = vmatpush.msra.mxu0 0.0
    %143 = vmatpush.msra.mxu0 0.0
    %144 = vmatpush.msra.mxu0 0.0
    %145 = vmatpush.msra.mxu0 0.0
    %146 = vmatpush.msra.mxu0 0.0
    %147 = vmatpush.msra.mxu0 0.0
    %148 = vmatpush.msra.mxu0 0.0
    %149 = vmatpush.msra.mxu0 0.0
    %150 = vmatpush.msra.mxu0 0.0
    %151 = vmatpush.msra.mxu0 0.0
    %152 = vmatpush.msra.mxu0 0.0
    %153 = vmatpush.msra.mxu0 %v51
    %154 = vmatpush.msra.mxu0 %v50
    %155 = vmatpush.msra.mxu0 %v49
    %156 = vmatpush.msra.mxu0 %v48
    %157 = vmatmul.f32.gmra.mxu0 %v130
    %v158 = vpop.f32.mrf.mxu0
    %v159 = vadd.f32 0.0, %v158
    %160 = vmatmul.f32.gmra.mxu0 %v133
    %v161 = vpop.f32.mrf.mxu0
    %v162 = vadd.f32 0.0, %v161
    %163 = vmatmul.f32.gmra.mxu0 %v136
    %v164 = vpop.f32.mrf.mxu0
    %v165 = vadd.f32 0.0, %v164
    %166 = vmatmul.f32.gmra.mxu0 %v139
    %v167 = vpop.f32.mrf.mxu0
    %v168 = vadd.f32 0.0, %v167
    %169 = vdwg.mxu0
    %v170 = vperm.slane %v128, 0
    %v172 = vsel %vm52, %v159, 0
    %v175 = vsel %vm52, %v162, 0
    %v178 = vsel %vm52, %v165, 0
    %v181 = vsel %vm52, %v168, 0
    %183 = vmatpush.msra.mxu0 0.0
    %184 = vmatpush.msra.mxu0 0.0
    %185 = vmatpush.msra.mxu0 0.0
    %186 = vmatpush.msra.mxu0 0.0
    %187 = vmatpush.msra.mxu0 0.0
    %188 = vmatpush.msra.mxu0 0.0
    %189 = vmatpush.msra.mxu0 0.0
    %190 = vmatpush.msra.mxu0 0.0
    %191 = vmatpush.msra.mxu0 0.0
    %192 = vmatpush.msra.mxu0 0.0
    %193 = vmatpush.msra.mxu0 0.0
    %194 = vmatpush.msra.mxu0 0.0
    %195 = vmatpush.msra.mxu0 %v111
    %196 = vmatpush.msra.mxu0 %v110
    %197 = vmatpush.msra.mxu0 %v109
    %198 = vmatpush.msra.mxu0 %v108
    %199 = vmatmul.f32.gmra.mxu0 %v172
    %v200 = vpop.f32.mrf.mxu0
    %v201 = vadd.f32 %v170, %v200
    %202 = vmatmul.f32.gmra.mxu0 %v175
    %v203 = vpop.f32.mrf.mxu0
    %v204 = vadd.f32 %v170, %v203
    %205 = vmatmul.f32.gmra.mxu0 %v178
    %v206 = vpop.f32.mrf.mxu0
    %v207 = vadd.f32 %v170, %v206
    %208 = vmatmul.f32.gmra.mxu0 %v181
    %v209 = vpop.f32.mrf.mxu0
    %v210 = vadd.f32 %v170, %v209
    %211 = vdwg.mxu0
    %v212 = vmax.f32 %v201, 0.0
    %v213 = vmax.f32 %v204, 0.0
    %v214 = vmax.f32 %v207, 0.0
    %v215 = vmax.f32 %v210, 0.0
    %v216 = vperm.slane %v128, 1
    %v218 = vsel %vm52, %v212, 0
    %v221 = vsel %vm52, %v213, 0
    %v224 = vsel %vm52, %v214, 0
    %v227 = vsel %vm52, %v215, 0
    %229 = vmatpush.msra.mxu0 0.0
    %230 = vmatpush.msra.mxu0 0.0
    %231 = vmatpush.msra.mxu0 0.0
    %232 = vmatpush.msra.mxu0 0.0
    %233 = vmatpush.msra.mxu0 0.0
    %234 = vmatpush.msra.mxu0 0.0
    %235 = vmatpush.msra.mxu0 0.0
    %236 = vmatpush.msra.mxu0 0.0
    %237 = vmatpush.msra.mxu0 0.0
    %238 = vmatpush.msra.mxu0 0.0
    %239 = vmatpush.msra.mxu0 0.0
    %240 = vmatpush.msra.mxu0 0.0
    %241 = vmatpush.msra.mxu0 %v115
    %242 = vmatpush.msra.mxu0 %v114
    %243 = vmatpush.msra.mxu0 %v113
    %244 = vmatpush.msra.mxu0 %v112
    %245 = vmatmul.f32.gmra.mxu0 %v218
    %v246 = vpop.f32.mrf.mxu0
    %v247 = vadd.f32 %v216, %v246
    %248 = vmatmul.f32.gmra.mxu0 %v221
    %v249 = vpop.f32.mrf.mxu0
    %v250 = vadd.f32 %v216, %v249
    %251 = vmatmul.f32.gmra.mxu0 %v224
    %v252 = vpop.f32.mrf.mxu0
    %v253 = vadd.f32 %v216, %v252
    %254 = vmatmul.f32.gmra.mxu0 %v227
    %v255 = vpop.f32.mrf.mxu0
    %v256 = vadd.f32 %v216, %v255
    %257 = vdwg.mxu0
    %v258 = vmax.f32 %v247, 0.0
    %v259 = vmax.f32 %v250, 0.0
    %v260 = vmax.f32 %v253, 0.0
    %v261 = vmax.f32 %v256, 0.0
    %v262 = vperm.slane %v128, 2
    %v264 = vsel %vm52, %v258, 0
    %v267 = vsel %vm52, %v259, 0
    %v270 = vsel %vm52, %v260, 0
    %v273 = vsel %vm52, %v261, 0
    %275 = vmatpush.msra.mxu0 0.0
    %276 = vmatpush.msra.mxu0 0.0
    %277 = vmatpush.msra.mxu0 0.0
    %278 = vmatpush.msra.mxu0 0.0
    %279 = vmatpush.msra.mxu0 0.0
    %280 = vmatpush.msra.mxu0 0.0
    %281 = vmatpush.msra.mxu0 0.0
    %282 = vmatpush.msra.mxu0 0.0
    %283 = vmatpush.msra.mxu0 0.0
    %284 = vmatpush.msra.mxu0 0.0
    %285 = vmatpush.msra.mxu0 0.0
    %286 = vmatpush.msra.mxu0 0.0
    %287 = vmatpush.msra.mxu0 %v119
    %288 = vmatpush.msra.mxu0 %v118
    %289 = vmatpush.msra.mxu0 %v117
    %290 = vmatpush.msra.mxu0 %v116
    %291 = vmatmul.f32.gmra.mxu0 %v264
    %v292 = vpop.f32.mrf.mxu0
    %v293 = vadd.f32 %v262, %v292
    %294 = vmatmul.f32.gmra.mxu0 %v267
    %v295 = vpop.f32.mrf.mxu0
    %v296 = vadd.f32 %v262, %v295
    %297 = vmatmul.f32.gmra.mxu0 %v270
    %v298 = vpop.f32.mrf.mxu0
    %v299 = vadd.f32 %v262, %v298
    %300 = vmatmul.f32.gmra.mxu0 %v273
    %v301 = vpop.f32.mrf.mxu0
    %v302 = vadd.f32 %v262, %v301
    %303 = vdwg.mxu0
    %v304 = vmax.f32 %v293, 0.0
    %v305 = vmax.f32 %v296, 0.0
    %v306 = vmax.f32 %v299, 0.0
    %v307 = vmax.f32 %v302, 0.0
    %v308 = vperm.slane %v128, 3
    %v310 = vsel %vm52, %v304, 0
    %v313 = vsel %vm52, %v305, 0
    %v316 = vsel %vm52, %v306, 0
    %v319 = vsel %vm52, %v307, 0
    %321 = vmatpush.msra.mxu0 0.0
    %322 = vmatpush.msra.mxu0 0.0
    %323 = vmatpush.msra.mxu0 0.0
    %324 = vmatpush.msra.mxu0 0.0
    %325 = vmatpush.msra.mxu0 0.0
    %326 = vmatpush.msra.mxu0 0.0
    %327 = vmatpush.msra.mxu0 0.0
    %328 = vmatpush.msra.mxu0 0.0
    %329 = vmatpush.msra.mxu0 0.0
    %330 = vmatpush.msra.mxu0 0.0
    %331 = vmatpush.msra.mxu0 0.0
    %332 = vmatpush.msra.mxu0 0.0
    %333 = vmatpush.msra.mxu0 %v123
    %334 = vmatpush.msra.mxu0 %v122
    %335 = vmatpush.msra.mxu0 %v121
    %336 = vmatpush.msra.mxu0 %v120
    %337 = vmatmul.f32.gmra.mxu0 %v310
    %v338 = vpop.f32.mrf.mxu0
    %v339 = vadd.f32 %v308, %v338
    %340 = vmatmul.f32.gmra.mxu0 %v313
    %v341 = vpop.f32.mrf.mxu0
    %v342 = vadd.f32 %v308, %v341
    %343 = vmatmul.f32.gmra.mxu0 %v316
    %v344 = vpop.f32.mrf.mxu0
    %v345 = vadd.f32 %v308, %v344
    %346 = vmatmul.f32.gmra.mxu0 %v319
    %v347 = vpop.f32.mrf.mxu0
    %v348 = vadd.f32 %v308, %v347
    %349 = vdwg.mxu0
    %v350 = vmax.f32 %v339, 0.0
    %v351 = vmax.f32 %v342, 0.0
    %v352 = vmax.f32 %v345, 0.0
    %v353 = vmax.f32 %v348, 0.0
    %v354 = vperm.slane %v128, 4
    %v356 = vsel %vm52, %v350, 0
    %v359 = vsel %vm52, %v351, 0
    %v362 = vsel %vm52, %v352, 0
    %v365 = vsel %vm52, %v353, 0
    %367 = vmatpush.msra.mxu0 0.0
    %368 = vmatpush.msra.mxu0 0.0
    %369 = vmatpush.msra.mxu0 0.0
    %370 = vmatpush.msra.mxu0 0.0
    %371 = vmatpush.msra.mxu0 0.0
    %372 = vmatpush.msra.mxu0 0.0
    %373 = vmatpush.msra.mxu0 0.0
    %374 = vmatpush.msra.mxu0 0.0
    %375 = vmatpush.msra.mxu0 0.0
    %376 = vmatpush.msra.mxu0 0.0
    %377 = vmatpush.msra.mxu0 0.0
    %378 = vmatpush.msra.mxu0 0.0
    %379 = vmatpush.msra.mxu0 %v127
    %380 = vmatpush.msra.mxu0 %v126
    %381 = vmatpush.msra.mxu0 %v125
    %382 = vmatpush.msra.mxu0 %v124
    %383 = vmatmul.f32.gmra.mxu0 %v356
    %v384 = vpop.f32.mrf.mxu0
    %v385 = vadd.f32 %v354, %v384
    %386 = vmatmul.f32.gmra.mxu0 %v359
    %v387 = vpop.f32.mrf.mxu0
    %v388 = vadd.f32 %v354, %v387
    %389 = vmatmul.f32.gmra.mxu0 %v362
    %v390 = vpop.f32.mrf.mxu0
    %v391 = vadd.f32 %v354, %v390
    %392 = vmatmul.f32.gmra.mxu0 %v365
    %v393 = vpop.f32.mrf.mxu0
    %v394 = vadd.f32 %v354, %v393
    %395 = vdwg.mxu0
    %v396 = vmax.f32 %v385, 0.0
    %v397 = vmax.f32 %v388, 0.0
    %v398 = vmax.f32 %v391, 0.0
    %v399 = vmax.f32 %v394, 0.0
    %v400 = vperm.slane %v128, 5
    %v401 = vmul.f32 %v396, %v400
    %v402 = vmul.f32 %v397, %v400
    %v403 = vmul.f32 %v398, %v400
    %v404 = vmul.f32 %v399, %v400
    %v405 = vperm.slane %v128, 6
    %v406 = vadd.f32 %v401, %v405
    %v407 = vadd.f32 %v402, %v405
    %v408 = vadd.f32 %v403, %v405
    %v409 = vadd.f32 %v404, %v405
    %v410 = vmax.f32 %v406, 0.0
    %v411 = vmax.f32 %v407, 0.0
    %v412 = vmax.f32 %v408, 0.0
    %v413 = vmax.f32 %v409, 0.0
    %414 = vmatpush.msra.mxu0 0.0
    %415 = vmatpush.msra.mxu0 0.0
    %416 = vmatpush.msra.mxu0 0.0
    %417 = vmatpush.msra.mxu0 0.0
    %418 = vmatpush.msra.mxu0 0.0
    %419 = vmatpush.msra.mxu0 0.0
    %420 = vmatpush.msra.mxu0 0.0
    %421 = vmatpush.msra.mxu0 0.0
    %422 = vmatpush.msra.mxu0 0.0
    %423 = vmatpush.msra.mxu0 0.0
    %424 = vmatpush.msra.mxu0 0.0
    %425 = vmatpush.msra.mxu0 0.0
    %426 = vmatpush.msra.mxu0 %v413
    %427 = vmatpush.msra.mxu0 %v412
    %428 = vmatpush.msra.mxu0 %v411
    %429 = vmatpush.msra.mxu0 %v410
    %430 = vmatmul.f32.gmra.mxu0 %v54
    %v431 = vpop.f32.mrf.mxu0
    %v432 = vadd.f32 0.0, %v431
    %433 = vdwg.mxu0
    %s434 = scalar_lea.vmem %s5, 32
    %v435 = vld [vmem:[%s434] sm:$0xff]
    %v436 = vld [vmem:[%s434 + $0x8] sm:$0xff]
    %v437 = vld [vmem:[%s434 + $0x10] sm:$0xff]
    %v438 = vld [vmem:[%s434 + $0x18] sm:$0xff]
    %v440 = vsel %vm52, %v432, 0
    %442 = vmatpush.msra.mxu0 0.0
    %443 = vmatpush.msra.mxu0 0.0
    %444 = vmatpush.msra.mxu0 0.0
    %445 = vmatpush.msra.mxu0 0.0
    %446 = vmatpush.msra.mxu0 0.0
    %447 = vmatpush.msra.mxu0 0.0
    %448 = vmatpush.msra.mxu0 0.0
    %449 = vmatpush.msra.mxu0 0.0
    %450 = vmatpush.msra.mxu0 0.0
    %451 = vmatpush.msra.mxu0 0.0
    %452 = vmatpush.msra.mxu0 0.0
    %453 = vmatpush.msra.mxu0 0.0
    %454 = vmatpush.msra.mxu0 %v438
    %455 = vmatpush.msra.mxu0 %v437
    %456 = vmatpush.msra.mxu0 %v436
    %457 = vmatpush.msra.mxu0 %v435
    %458 = vmatmul.f32.gmra.mxu0 %v440
    %v459 = vpop.f32.mrf.mxu0
    %v460 = vadd.f32 0.0, %v459
    %461 = vdwg.mxu0
    %v462 = vadd.f32 %v107, %v460
    %s463 = scalar_lea.vmem [#allocation2], 160
    %v464 = vld [vmem:[%s463] sm:$0xff]
    %v465 = vld [vmem:[%s463 + $0x8] sm:$0xff]
    %v466 = vld [vmem:[%s463 + $0x10] sm:$0xff]
    %v467 = vld [vmem:[%s463 + $0x18] sm:$0xff]
    %v468 = vld [vmem:[%s463 + $0x20] sm:$0xff]
    %v469 = vld [vmem:[%s463 + $0x28] sm:$0xff]
    %v470 = vld [vmem:[%s463 + $0x30] sm:$0xff]
    %v471 = vld [vmem:[%s463 + $0x38] sm:$0xff]
    %v472 = vld [vmem:[%s463 + $0x40] sm:$0xff]
    %v473 = vld [vmem:[%s463 + $0x48] sm:$0xff]
    %v474 = vld [vmem:[%s463 + $0x50] sm:$0xff]
    %v475 = vld [vmem:[%s463 + $0x58] sm:$0xff]
    %v476 = vld [vmem:[%s463 + $0x60] sm:$0xff]
    %v477 = vld [vmem:[%s463 + $0x68] sm:$0xff]
    %v478 = vld [vmem:[%s463 + $0x70] sm:$0xff]
    %v479 = vld [vmem:[%s463 + $0x78] sm:$0xff]
    %v480 = vld [vmem:[%s463 + $0x80] sm:$0xff]
    %v481 = vld [vmem:[%s463 + $0x88] sm:$0xff]
    %v482 = vld [vmem:[%s463 + $0x90] sm:$0xff]
    %v483 = vld [vmem:[%s463 + $0x98] sm:$0xff]
    %s484 = scalar_lea.vmem %s4, 8
    %v485 = vld [vmem:[%s484] sm:$0xff]
    %486 = vmatpush.msra.mxu0 0.0
    %487 = vmatpush.msra.mxu0 0.0
    %488 = vmatpush.msra.mxu0 0.0
    %489 = vmatpush.msra.mxu0 0.0
    %490 = vmatpush.msra.mxu0 0.0
    %491 = vmatpush.msra.mxu0 0.0
    %492 = vmatpush.msra.mxu0 0.0
    %493 = vmatpush.msra.mxu0 0.0
    %494 = vmatpush.msra.mxu0 0.0
    %495 = vmatpush.msra.mxu0 0.0
    %496 = vmatpush.msra.mxu0 0.0
    %497 = vmatpush.msra.mxu0 0.0
    %498 = vmatpush.msra.mxu0 %v413
    %499 = vmatpush.msra.mxu0 %v412
    %500 = vmatpush.msra.mxu0 %v411
    %501 = vmatpush.msra.mxu0 %v410
    %502 = vmatmul.f32.gmra.mxu0 %v130
    %v503 = vpop.f32.mrf.mxu0
    %v504 = vadd.f32 0.0, %v503
    %505 = vmatmul.f32.gmra.mxu0 %v133
    %v506 = vpop.f32.mrf.mxu0
    %v507 = vadd.f32 0.0, %v506
    %508 = vmatmul.f32.gmra.mxu0 %v136
    %v509 = vpop.f32.mrf.mxu0
    %v510 = vadd.f32 0.0, %v509
    %511 = vmatmul.f32.gmra.mxu0 %v139
    %v512 = vpop.f32.mrf.mxu0
    %v513 = vadd.f32 0.0, %v512
    %514 = vdwg.mxu0
    %v515 = vperm.slane %v485, 0
    %v517 = vsel %vm52, %v504, 0
    %v520 = vsel %vm52, %v507, 0
    %v523 = vsel %vm52, %v510, 0
    %v526 = vsel %vm52, %v513, 0
    %528 = vmatpush.msra.mxu0 0.0
    %529 = vmatpush.msra.mxu0 0.0
    %530 = vmatpush.msra.mxu0 0.0
    %531 = vmatpush.msra.mxu0 0.0
    %532 = vmatpush.msra.mxu0 0.0
    %533 = vmatpush.msra.mxu0 0.0
    %534 = vmatpush.msra.mxu0 0.0
    %535 = vmatpush.msra.mxu0 0.0
    %536 = vmatpush.msra.mxu0 0.0
    %537 = vmatpush.msra.mxu0 0.0
    %538 = vmatpush.msra.mxu0 0.0
    %539 = vmatpush.msra.mxu0 0.0
    %540 = vmatpush.msra.mxu0 %v467
    %541 = vmatpush.msra.mxu0 %v466
    %542 = vmatpush.msra.mxu0 %v465
    %543 = vmatpush.msra.mxu0 %v464
    %544 = vmatmul.f32.gmra.mxu0 %v517
    %v545 = vpop.f32.mrf.mxu0
    %v546 = vadd.f32 %v515, %v545
    %547 = vmatmul.f32.gmra.mxu0 %v520
    %v548 = vpop.f32.mrf.mxu0
    %v549 = vadd.f32 %v515, %v548
    %550 = vmatmul.f32.gmra.mxu0 %v523
    %v551 = vpop.f32.mrf.mxu0
    %v552 = vadd.f32 %v515, %v551
    %553 = vmatmul.f32.gmra.mxu0 %v526
    %v554 = vpop.f32.mrf.mxu0
    %v555 = vadd.f32 %v515, %v554
    %556 = vdwg.mxu0
    %v557 = vmax.f32 %v546, 0.0
    %v558 = vmax.f32 %v549, 0.0
    %v559 = vmax.f32 %v552, 0.0
    %v560 = vmax.f32 %v555, 0.0
    %v561 = vperm.slane %v485, 1
    %v563 = vsel %vm52, %v557, 0
    %v566 = vsel %vm52, %v558, 0
    %v569 = vsel %vm52, %v559, 0
    %v572 = vsel %vm52, %v560, 0
    %574 = vmatpush.msra.mxu0 0.0
    %575 = vmatpush.msra.mxu0 0.0
    %576 = vmatpush.msra.mxu0 0.0
    %577 = vmatpush.msra.mxu0 0.0
    %578 = vmatpush.msra.mxu0 0.0
    %579 = vmatpush.msra.mxu0 0.0
    %580 = vmatpush.msra.mxu0 0.0
    %581 = vmatpush.msra.mxu0 0.0
    %582 = vmatpush.msra.mxu0 0.0
    %583 = vmatpush.msra.mxu0 0.0
    %584 = vmatpush.msra.mxu0 0.0
    %585 = vmatpush.msra.mxu0 0.0
    %586 = vmatpush.msra.mxu0 %v471
    %587 = vmatpush.msra.mxu0 %v470
    %588 = vmatpush.msra.mxu0 %v469
    %589 = vmatpush.msra.mxu0 %v468
    %590 = vmatmul.f32.gmra.mxu0 %v563
    %v591 = vpop.f32.mrf.mxu0
    %v592 = vadd.f32 %v561, %v591
    %593 = vmatmul.f32.gmra.mxu0 %v566
    %v594 = vpop.f32.mrf.mxu0
    %v595 = vadd.f32 %v561, %v594
    %596 = vmatmul.f32.gmra.mxu0 %v569
    %v597 = vpop.f32.mrf.mxu0
    %v598 = vadd.f32 %v561, %v597
    %599 = vmatmul.f32.gmra.mxu0 %v572
    %v600 = vpop.f32.mrf.mxu0
    %v601 = vadd.f32 %v561, %v600
    %602 = vdwg.mxu0
    %v603 = vmax.f32 %v592, 0.0
    %v604 = vmax.f32 %v595, 0.0
    %v605 = vmax.f32 %v598, 0.0
    %v606 = vmax.f32 %v601, 0.0
    %v607 = vperm.slane %v485, 2
    %v609 = vsel %vm52, %v603, 0
    %v612 = vsel %vm52, %v604, 0
    %v615 = vsel %vm52, %v605, 0
    %v618 = vsel %vm52, %v606, 0
    %620 = vmatpush.msra.mxu0 0.0
    %621 = vmatpush.msra.mxu0 0.0
    %622 = vmatpush.msra.mxu0 0.0
    %623 = vmatpush.msra.mxu0 0.0
    %624 = vmatpush.msra.mxu0 0.0
    %625 = vmatpush.msra.mxu0 0.0
    %626 = vmatpush.msra.mxu0 0.0
    %627 = vmatpush.msra.mxu0 0.0
    %628 = vmatpush.msra.mxu0 0.0
    %629 = vmatpush.msra.mxu0 0.0
    %630 = vmatpush.msra.mxu0 0.0
    %631 = vmatpush.msra.mxu0 0.0
    %632 = vmatpush.msra.mxu0 %v475
    %633 = vmatpush.msra.mxu0 %v474
    %634 = vmatpush.msra.mxu0 %v473
    %635 = vmatpush.msra.mxu0 %v472
    %636 = vmatmul.f32.gmra.mxu0 %v609
    %v637 = vpop.f32.mrf.mxu0
    %v638 = vadd.f32 %v607, %v637
    %639 = vmatmul.f32.gmra.mxu0 %v612
    %v640 = vpop.f32.mrf.mxu0
    %v641 = vadd.f32 %v607, %v640
    %642 = vmatmul.f32.gmra.mxu0 %v615
    %v643 = vpop.f32.mrf.mxu0
    %v644 = vadd.f32 %v607, %v643
    %645 = vmatmul.f32.gmra.mxu0 %v618
    %v646 = vpop.f32.mrf.mxu0
    %v647 = vadd.f32 %v607, %v646
    %648 = vdwg.mxu0
    %v649 = vmax.f32 %v638, 0.0
    %v650 = vmax.f32 %v641, 0.0
    %v651 = vmax.f32 %v644, 0.0
    %v652 = vmax.f32 %v647, 0.0
    %v653 = vperm.slane %v485, 3
    %v655 = vsel %vm52, %v649, 0
    %v658 = vsel %vm52, %v650, 0
    %v661 = vsel %vm52, %v651, 0
    %v664 = vsel %vm52, %v652, 0
    %666 = vmatpush.msra.mxu0 0.0
    %667 = vmatpush.msra.mxu0 0.0
    %668 = vmatpush.msra.mxu0 0.0
    %669 = vmatpush.msra.mxu0 0.0
    %670 = vmatpush.msra.mxu0 0.0
    %671 = vmatpush.msra.mxu0 0.0
    %672 = vmatpush.msra.mxu0 0.0
    %673 = vmatpush.msra.mxu0 0.0
    %674 = vmatpush.msra.mxu0 0.0
    %675 = vmatpush.msra.mxu0 0.0
    %676 = vmatpush.msra.mxu0 0.0
    %677 = vmatpush.msra.mxu0 0.0
    %678 = vmatpush.msra.mxu0 %v479
    %679 = vmatpush.msra.mxu0 %v478
    %680 = vmatpush.msra.mxu0 %v477
    %681 = vmatpush.msra.mxu0 %v476
    %682 = vmatmul.f32.gmra.mxu0 %v655
    %v683 = vpop.f32.mrf.mxu0
    %v684 = vadd.f32 %v653, %v683
    %685 = vmatmul.f32.gmra.mxu0 %v658
    %v686 = vpop.f32.mrf.mxu0
    %v687 = vadd.f32 %v653, %v686
    %688 = vmatmul.f32.gmra.mxu0 %v661
    %v689 = vpop.f32.mrf.mxu0
    %v690 = vadd.f32 %v653, %v689
    %691 = vmatmul.f32.gmra.mxu0 %v664
    %v692 = vpop.f32.mrf.mxu0
    %v693 = vadd.f32 %v653, %v692
    %694 = vdwg.mxu0
    %v695 = vmax.f32 %v684, 0.0
    %v696 = vmax.f32 %v687, 0.0
    %v697 = vmax.f32 %v690, 0.0
    %v698 = vmax.f32 %v693, 0.0
    %v699 = vperm.slane %v485, 4
    %v701 = vsel %vm52, %v695, 0
    %v704 = vsel %vm52, %v696, 0
    %v707 = vsel %vm52, %v697, 0
    %v710 = vsel %vm52, %v698, 0
    %712 = vmatpush.msra.mxu0 0.0
    %713 = vmatpush.msra.mxu0 0.0
    %714 = vmatpush.msra.mxu0 0.0
    %715 = vmatpush.msra.mxu0 0.0
    %716 = vmatpush.msra.mxu0 0.0
    %717 = vmatpush.msra.mxu0 0.0
    %718 = vmatpush.msra.mxu0 0.0
    %719 = vmatpush.msra.mxu0 0.0
    %720 = vmatpush.msra.mxu0 0.0
    %721 = vmatpush.msra.mxu0 0.0
    %722 = vmatpush.msra.mxu0 0.0
    %723 = vmatpush.msra.mxu0 0.0
    %724 = vmatpush.msra.mxu0 %v483
    %725 = vmatpush.msra.mxu0 %v482
    %726 = vmatpush.msra.mxu0 %v481
    %727 = vmatpush.msra.mxu0 %v480
    %728 = vmatmul.f32.gmra.mxu0 %v701
    %v729 = vpop.f32.mrf.mxu0
    %v730 = vadd.f32 %v699, %v729
    %731 = vmatmul.f32.gmra.mxu0 %v704
    %v732 = vpop.f32.mrf.mxu0
    %v733 = vadd.f32 %v699, %v732
    %734 = vmatmul.f32.gmra.mxu0 %v707
    %v735 = vpop.f32.mrf.mxu0
    %v736 = vadd.f32 %v699, %v735
    %737 = vmatmul.f32.gmra.mxu0 %v710
    %v738 = vpop.f32.mrf.mxu0
    %v739 = vadd.f32 %v699, %v738
    %740 = vdwg.mxu0
    %v741 = vmax.f32 %v730, 0.0
    %v742 = vmax.f32 %v733, 0.0
    %v743 = vmax.f32 %v736, 0.0
    %v744 = vmax.f32 %v739, 0.0
    %v745 = vperm.slane %v485, 5
    %v746 = vmul.f32 %v741, %v745
    %v747 = vmul.f32 %v742, %v745
    %v748 = vmul.f32 %v743, %v745
    %v749 = vmul.f32 %v744, %v745
    %v750 = vperm.slane %v485, 6
    %v751 = vadd.f32 %v746, %v750
    %v752 = vadd.f32 %v747, %v750
    %v753 = vadd.f32 %v748, %v750
    %v754 = vadd.f32 %v749, %v750
    %v755 = vmax.f32 %v751, 0.0
    %v756 = vmax.f32 %v752, 0.0
    %v757 = vmax.f32 %v753, 0.0
    %v758 = vmax.f32 %v754, 0.0
    %759 = vmatpush.msra.mxu0 0.0
    %760 = vmatpush.msra.mxu0 0.0
    %761 = vmatpush.msra.mxu0 0.0
    %762 = vmatpush.msra.mxu0 0.0
    %763 = vmatpush.msra.mxu0 0.0
    %764 = vmatpush.msra.mxu0 0.0
    %765 = vmatpush.msra.mxu0 0.0
    %766 = vmatpush.msra.mxu0 0.0
    %767 = vmatpush.msra.mxu0 0.0
    %768 = vmatpush.msra.mxu0 0.0
    %769 = vmatpush.msra.mxu0 0.0
    %770 = vmatpush.msra.mxu0 0.0
    %771 = vmatpush.msra.mxu0 %v758
    %772 = vmatpush.msra.mxu0 %v757
    %773 = vmatpush.msra.mxu0 %v756
    %774 = vmatpush.msra.mxu0 %v755
    %775 = vmatmul.f32.gmra.mxu0 %v54
    %v776 = vpop.f32.mrf.mxu0
    %v777 = vadd.f32 0.0, %v776
    %778 = vdwg.mxu0
    %s779 = scalar_lea.vmem %s5, 64
    %v780 = vld [vmem:[%s779] sm:$0xff]
    %v781 = vld [vmem:[%s779 + $0x8] sm:$0xff]
    %v782 = vld [vmem:[%s779 + $0x10] sm:$0xff]
    %v783 = vld [vmem:[%s779 + $0x18] sm:$0xff]
    %v785 = vsel %vm52, %v777, 0
    %787 = vmatpush.msra.mxu0 0.0
    %788 = vmatpush.msra.mxu0 0.0
    %789 = vmatpush.msra.mxu0 0.0
    %790 = vmatpush.msra.mxu0 0.0
    %791 = vmatpush.msra.mxu0 0.0
    %792 = vmatpush.msra.mxu0 0.0
    %793 = vmatpush.msra.mxu0 0.0
    %794 = vmatpush.msra.mxu0 0.0
    %795 = vmatpush.msra.mxu0 0.0
    %796 = vmatpush.msra.mxu0 0.0
    %797 = vmatpush.msra.mxu0 0.0
    %798 = vmatpush.msra.mxu0 0.0
    %799 = vmatpush.msra.mxu0 %v783
    %800 = vmatpush.msra.mxu0 %v782
    %801 = vmatpush.msra.mxu0 %v781
    %802 = vmatpush.msra.mxu0 %v780
    %803 = vmatmul.f32.gmra.mxu0 %v785
    %v804 = vpop.f32.mrf.mxu0
    %v805 = vadd.f32 0.0, %v804
    %806 = vdwg.mxu0
    %v807 = vadd.f32 %v462, %v805
    %s808 = scalar_lea.vmem [#allocation2], 320
    %v809 = vld [vmem:[%s808] sm:$0xff]
    %v810 = vld [vmem:[%s808 + $0x8] sm:$0xff]
    %v811 = vld [vmem:[%s808 + $0x10] sm:$0xff]
    %v812 = vld [vmem:[%s808 + $0x18] sm:$0xff]
    %v813 = vld [vmem:[%s808 + $0x20] sm:$0xff]
    %v814 = vld [vmem:[%s808 + $0x28] sm:$0xff]
    %v815 = vld [vmem:[%s808 + $0x30] sm:$0xff]
    %v816 = vld [vmem:[%s808 + $0x38] sm:$0xff]
    %v817 = vld [vmem:[%s808 + $0x40] sm:$0xff]
    %v818 = vld [vmem:[%s808 + $0x48] sm:$0xff]
    %v819 = vld [vmem:[%s808 + $0x50] sm:$0xff]
    %v820 = vld [vmem:[%s808 + $0x58] sm:$0xff]
    %v821 = vld [vmem:[%s808 + $0x60] sm:$0xff]
    %v822 = vld [vmem:[%s808 + $0x68] sm:$0xff]
    %v823 = vld [vmem:[%s808 + $0x70] sm:$0xff]
    %v824 = vld [vmem:[%s808 + $0x78] sm:$0xff]
    %v825 = vld [vmem:[%s808 + $0x80] sm:$0xff]
    %v826 = vld [vmem:[%s808 + $0x88] sm:$0xff]
    %v827 = vld [vmem:[%s808 + $0x90] sm:$0xff]
    %v828 = vld [vmem:[%s808 + $0x98] sm:$0xff]
    %s829 = scalar_lea.vmem %s4, 16
    %v830 = vld [vmem:[%s829] sm:$0xff]
    %831 = vmatpush.msra.mxu0 0.0
    %832 = vmatpush.msra.mxu0 0.0
    %833 = vmatpush.msra.mxu0 0.0
    %834 = vmatpush.msra.mxu0 0.0
    %835 = vmatpush.msra.mxu0 0.0
    %836 = vmatpush.msra.mxu0 0.0
    %837 = vmatpush.msra.mxu0 0.0
    %838 = vmatpush.msra.mxu0 0.0
    %839 = vmatpush.msra.mxu0 0.0
    %840 = vmatpush.msra.mxu0 0.0
    %841 = vmatpush.msra.mxu0 0.0
    %842 = vmatpush.msra.mxu0 0.0
    %843 = vmatpush.msra.mxu0 %v758
    %844 = vmatpush.msra.mxu0 %v757
    %845 = vmatpush.msra.mxu0 %v756
    %846 = vmatpush.msra.mxu0 %v755
    %847 = vmatmul.f32.gmra.mxu0 %v130
    %v848 = vpop.f32.mrf.mxu0
    %v849 = vadd.f32 0.0, %v848
    %850 = vmatmul.f32.gmra.mxu0 %v133
    %v851 = vpop.f32.mrf.mxu0
    %v852 = vadd.f32 0.0, %v851
    %853 = vmatmul.f32.gmra.mxu0 %v136
    %v854 = vpop.f32.mrf.mxu0
    %v855 = vadd.f32 0.0, %v854
    %856 = vmatmul.f32.gmra.mxu0 %v139
    %v857 = vpop.f32.mrf.mxu0
    %v858 = vadd.f32 0.0, %v857
    %859 = vdwg.mxu0
    %v860 = vperm.slane %v830, 0
    %v862 = vsel %vm52, %v849, 0
    %v865 = vsel %vm52, %v852, 0
    %v868 = vsel %vm52, %v855, 0
    %v871 = vsel %vm52, %v858, 0
    %873 = vmatpush.msra.mxu0 0.0
    %874 = vmatpush.msra.mxu0 0.0
    %875 = vmatpush.msra.mxu0 0.0
    %876 = vmatpush.msra.mxu0 0.0
    %877 = vmatpush.msra.mxu0 0.0
    %878 = vmatpush.msra.mxu0 0.0
    %879 = vmatpush.msra.mxu0 0.0
    %880 = vmatpush.msra.mxu0 0.0
    %881 = vmatpush.msra.mxu0 0.0
    %882 = vmatpush.msra.mxu0 0.0
    %883 = vmatpush.msra.mxu0 0.0
    %884 = vmatpush.msra.mxu0 0.0
    %885 = vmatpush.msra.mxu0 %v812
    %886 = vmatpush.msra.mxu0 %v811
    %887 = vmatpush.msra.mxu0 %v810
    %888 = vmatpush.msra.mxu0 %v809
    %889 = vmatmul.f32.gmra.mxu0 %v862
    %v890 = vpop.f32.mrf.mxu0
    %v891 = vadd.f32 %v860, %v890
    %892 = vmatmul.f32.gmra.mxu0 %v865
    %v893 = vpop.f32.mrf.mxu0
    %v894 = vadd.f32 %v860, %v893
    %895 = vmatmul.f32.gmra.mxu0 %v868
    %v896 = vpop.f32.mrf.mxu0
    %v897 = vadd.f32 %v860, %v896
    %898 = vmatmul.f32.gmra.mxu0 %v871
    %v899 = vpop.f32.mrf.mxu0
    %v900 = vadd.f32 %v860, %v899
    %901 = vdwg.mxu0
    %v902 = vmax.f32 %v891, 0.0
    %v903 = vmax.f32 %v894, 0.0
    %v904 = vmax.f32 %v897, 0.0
    %v905 = vmax.f32 %v900, 0.0
    %v906 = vperm.slane %v830, 1
    %v908 = vsel %vm52, %v902, 0
    %v911 = vsel %vm52, %v903, 0
    %v914 = vsel %vm52, %v904, 0
    %v917 = vsel %vm52, %v905, 0
    %919 = vmatpush.msra.mxu0 0.0
    %920 = vmatpush.msra.mxu0 0.0
    %921 = vmatpush.msra.mxu0 0.0
    %922 = vmatpush.msra.mxu0 0.0
    %923 = vmatpush.msra.mxu0 0.0
    %924 = vmatpush.msra.mxu0 0.0
    %925 = vmatpush.msra.mxu0 0.0
    %926 = vmatpush.msra.mxu0 0.0
    %927 = vmatpush.msra.mxu0 0.0
    %928 = vmatpush.msra.mxu0 0.0
    %929 = vmatpush.msra.mxu0 0.0
    %930 = vmatpush.msra.mxu0 0.0
    %931 = vmatpush.msra.mxu0 %v816
    %932 = vmatpush.msra.mxu0 %v815
    %933 = vmatpush.msra.mxu0 %v814
    %934 = vmatpush.msra.mxu0 %v813
    %935 = vmatmul.f32.gmra.mxu0 %v908
    %v936 = vpop.f32.mrf.mxu0
    %v937 = vadd.f32 %v906, %v936
    %938 = vmatmul.f32.gmra.mxu0 %v911
    %v939 = vpop.f32.mrf.mxu0
    %v940 = vadd.f32 %v906, %v939
    %941 = vmatmul.f32.gmra.mxu0 %v914
    %v942 = vpop.f32.mrf.mxu0
    %v943 = vadd.f32 %v906, %v942
    %944 = vmatmul.f32.gmra.mxu0 %v917
    %v945 = vpop.f32.mrf.mxu0
    %v946 = vadd.f32 %v906, %v945
    %947 = vdwg.mxu0
    %v948 = vmax.f32 %v937, 0.0
    %v949 = vmax.f32 %v940, 0.0
    %v950 = vmax.f32 %v943, 0.0
    %v951 = vmax.f32 %v946, 0.0
    %v952 = vperm.slane %v830, 2
    %v954 = vsel %vm52, %v948, 0
    %v957 = vsel %vm52, %v949, 0
    %v960 = vsel %vm52, %v950, 0
    %v963 = vsel %vm52, %v951, 0
    %965 = vmatpush.msra.mxu0 0.0
    %966 = vmatpush.msra.mxu0 0.0
    %967 = vmatpush.msra.mxu0 0.0
    %968 = vmatpush.msra.mxu0 0.0
    %969 = vmatpush.msra.mxu0 0.0
    %970 = vmatpush.msra.mxu0 0.0
    %971 = vmatpush.msra.mxu0 0.0
    %972 = vmatpush.msra.mxu0 0.0
    %973 = vmatpush.msra.mxu0 0.0
    %974 = vmatpush.msra.mxu0 0.0
    %975 = vmatpush.msra.mxu0 0.0
    %976 = vmatpush.msra.mxu0 0.0
    %977 = vmatpush.msra.mxu0 %v820
    %978 = vmatpush.msra.mxu0 %v819
    %979 = vmatpush.msra.mxu0 %v818
    %980 = vmatpush.msra.mxu0 %v817
    %981 = vmatmul.f32.gmra.mxu0 %v954
    %v982 = vpop.f32.mrf.mxu0
    %v983 = vadd.f32 %v952, %v982
    %984 = vmatmul.f32.gmra.mxu0 %v957
    %v985 = vpop.f32.mrf.mxu0
    %v986 = vadd.f32 %v952, %v985
    %987 = vmatmul.f32.gmra.mxu0 %v960
    %v988 = vpop.f32.mrf.mxu0
    %v989 = vadd.f32 %v952, %v988
    %990 = vmatmul.f32.gmra.mxu0 %v963
    %v991 = vpop.f32.mrf.mxu0
    %v992 = vadd.f32 %v952, %v991
    %993 = vdwg.mxu0
    %v994 = vmax.f32 %v983, 0.0
    %v995 = vmax.f32 %v986, 0.0
    %v996 = vmax.f32 %v989, 0.0
    %v997 = vmax.f32 %v992, 0.0
    %v998 = vperm.slane %v830, 3
    %v1000 = vsel %vm52, %v994, 0
    %v1003 = vsel %vm52, %v995, 0
    %v1006 = vsel %vm52, %v996, 0
    %v1009 = vsel %vm52, %v997, 0
    %1011 = vmatpush.msra.mxu0 0.0
    %1012 = vmatpush.msra.mxu0 0.0
    %1013 = vmatpush.msra.mxu0 0.0
    %1014 = vmatpush.msra.mxu0 0.0
    %1015 = vmatpush.msra.mxu0 0.0
    %1016 = vmatpush.msra.mxu0 0.0
    %1017 = vmatpush.msra.mxu0 0.0
    %1018 = vmatpush.msra.mxu0 0.0
    %1019 = vmatpush.msra.mxu0 0.0
    %1020 = vmatpush.msra.mxu0 0.0
    %1021 = vmatpush.msra.mxu0 0.0
    %1022 = vmatpush.msra.mxu0 0.0
    %1023 = vmatpush.msra.mxu0 %v824
    %1024 = vmatpush.msra.mxu0 %v823
    %1025 = vmatpush.msra.mxu0 %v822
    %1026 = vmatpush.msra.mxu0 %v821
    %1027 = vmatmul.f32.gmra.mxu0 %v1000
    %v1028 = vpop.f32.mrf.mxu0
    %v1029 = vadd.f32 %v998, %v1028
    %1030 = vmatmul.f32.gmra.mxu0 %v1003
    %v1031 = vpop.f32.mrf.mxu0
    %v1032 = vadd.f32 %v998, %v1031
    %1033 = vmatmul.f32.gmra.mxu0 %v1006
    %v1034 = vpop.f32.mrf.mxu0
    %v1035 = vadd.f32 %v998, %v1034
    %1036 = vmatmul.f32.gmra.mxu0 %v1009
    %v1037 = vpop.f32.mrf.mxu0
    %v1038 = vadd.f32 %v998, %v1037
    %1039 = vdwg.mxu0
    %v1040 = vmax.f32 %v1029, 0.0
    %v1041 = vmax.f32 %v1032, 0.0
    %v1042 = vmax.f32 %v1035, 0.0
    %v1043 = vmax.f32 %v1038, 0.0
    %v1044 = vperm.slane %v830, 4
    %v1046 = vsel %vm52, %v1040, 0
    %v1049 = vsel %vm52, %v1041, 0
    %v1052 = vsel %vm52, %v1042, 0
    %v1055 = vsel %vm52, %v1043, 0
    %1057 = vmatpush.msra.mxu0 0.0
    %1058 = vmatpush.msra.mxu0 0.0
    %1059 = vmatpush.msra.mxu0 0.0
    %1060 = vmatpush.msra.mxu0 0.0
    %1061 = vmatpush.msra.mxu0 0.0
    %1062 = vmatpush.msra.mxu0 0.0
    %1063 = vmatpush.msra.mxu0 0.0
    %1064 = vmatpush.msra.mxu0 0.0
    %1065 = vmatpush.msra.mxu0 0.0
    %1066 = vmatpush.msra.mxu0 0.0
    %1067 = vmatpush.msra.mxu0 0.0
    %1068 = vmatpush.msra.mxu0 0.0
    %1069 = vmatpush.msra.mxu0 %v828
    %1070 = vmatpush.msra.mxu0 %v827
    %1071 = vmatpush.msra.mxu0 %v826
    %1072 = vmatpush.msra.mxu0 %v825
    %1073 = vmatmul.f32.gmra.mxu0 %v1046
    %v1074 = vpop.f32.mrf.mxu0
    %v1075 = vadd.f32 %v1044, %v1074
    %1076 = vmatmul.f32.gmra.mxu0 %v1049
    %v1077 = vpop.f32.mrf.mxu0
    %v1078 = vadd.f32 %v1044, %v1077
    %1079 = vmatmul.f32.gmra.mxu0 %v1052
    %v1080 = vpop.f32.mrf.mxu0
    %v1081 = vadd.f32 %v1044, %v1080
    %1082 = vmatmul.f32.gmra.mxu0 %v1055
    %v1083 = vpop.f32.mrf.mxu0
    %v1084 = vadd.f32 %v1044, %v1083
    %1085 = vdwg.mxu0
    %v1086 = vmax.f32 %v1075, 0.0
    %v1087 = vmax.f32 %v1078, 0.0
    %v1088 = vmax.f32 %v1081, 0.0
    %v1089 = vmax.f32 %v1084, 0.0
    %v1090 = vperm.slane %v830, 5
    %v1091 = vmul.f32 %v1086, %v1090
    %v1092 = vmul.f32 %v1087, %v1090
    %v1093 = vmul.f32 %v1088, %v1090
    %v1094 = vmul.f32 %v1089, %v1090
    %v1095 = vperm.slane %v830, 6
    %v1096 = vadd.f32 %v1091, %v1095
    %v1097 = vadd.f32 %v1092, %v1095
    %v1098 = vadd.f32 %v1093, %v1095
    %v1099 = vadd.f32 %v1094, %v1095
    %v1100 = vmax.f32 %v1096, 0.0
    %v1101 = vmax.f32 %v1097, 0.0
    %v1102 = vmax.f32 %v1098, 0.0
    %v1103 = vmax.f32 %v1099, 0.0
    %1104 = vmatpush.msra.mxu0 0.0
    %1105 = vmatpush.msra.mxu0 0.0
    %1106 = vmatpush.msra.mxu0 0.0
    %1107 = vmatpush.msra.mxu0 0.0
    %1108 = vmatpush.msra.mxu0 0.0
    %1109 = vmatpush.msra.mxu0 0.0
    %1110 = vmatpush.msra.mxu0 0.0
    %1111 = vmatpush.msra.mxu0 0.0
    %1112 = vmatpush.msra.mxu0 0.0
    %1113 = vmatpush.msra.mxu0 0.0
    %1114 = vmatpush.msra.mxu0 0.0
    %1115 = vmatpush.msra.mxu0 0.0
    %1116 = vmatpush.msra.mxu0 %v1103
    %1117 = vmatpush.msra.mxu0 %v1102
    %1118 = vmatpush.msra.mxu0 %v1101
    %1119 = vmatpush.msra.mxu0 %v1100
    %1120 = vmatmul.f32.gmra.mxu0 %v54
    %v1121 = vpop.f32.mrf.mxu0
    %v1122 = vadd.f32 0.0, %v1121
    %1123 = vdwg.mxu0
    %s1124 = scalar_lea.vmem %s5, 96
    %v1125 = vld [vmem:[%s1124] sm:$0xff]
    %v1126 = vld [vmem:[%s1124 + $0x8] sm:$0xff]
    %v1127 = vld [vmem:[%s1124 + $0x10] sm:$0xff]
    %v1128 = vld [vmem:[%s1124 + $0x18] sm:$0xff]
    %v1130 = vsel %vm52, %v1122, 0
    %1132 = vmatpush.msra.mxu0 0.0
    %1133 = vmatpush.msra.mxu0 0.0
    %1134 = vmatpush.msra.mxu0 0.0
    %1135 = vmatpush.msra.mxu0 0.0
    %1136 = vmatpush.msra.mxu0 0.0
    %1137 = vmatpush.msra.mxu0 0.0
    %1138 = vmatpush.msra.mxu0 0.0
    %1139 = vmatpush.msra.mxu0 0.0
    %1140 = vmatpush.msra.mxu0 0.0
    %1141 = vmatpush.msra.mxu0 0.0
    %1142 = vmatpush.msra.mxu0 0.0
    %1143 = vmatpush.msra.mxu0 0.0
    %1144 = vmatpush.msra.mxu0 %v1128
    %1145 = vmatpush.msra.mxu0 %v1127
    %1146 = vmatpush.msra.mxu0 %v1126
    %1147 = vmatpush.msra.mxu0 %v1125
    %1148 = vmatmul.f32.gmra.mxu0 %v1130
    %v1149 = vpop.f32.mrf.mxu0
    %v1150 = vadd.f32 0.0, %v1149
    %1151 = vdwg.mxu0
    %v1152 = vadd.f32 %v807, %v1150
    %1153 = vst [vmem:[#allocation5] sm:$0x3] %v1152
    // Predicated region
    $region34: #{gin_forward.1} parent=1 // pred_check
      _
    $region35: #{gin_forward.1} parent=1 // pred_check_branch
      %1155 = sbr.rel (0) target = $region37
    $region36: #{gin_forward.1} parent=1 // pred_region
      %1157 = vsyncadd [#allocation4], 0
      %s1159 = sshll.u32 [#allocation5], 4
      %s1160 = int_to_ptr.vmem [resolvable:$true] %s1159
      %s1161 = sshll.u32 %s7, 4
      %s1162 = int_to_ptr.hbm [resolvable:$true] %s1161
      %1164 = dma.vmem_to_hbm [thread:$0]  %s1160, 32, %s1162, [#allocation4]
    $region37: #{gin_forward.1} parent=1 // pred_fallthru
      _
    // Predicated region
    $region38: #{gin_forward.1} parent=1 // pred_check
      _
    $region39: #{gin_forward.1} parent=1 // pred_check_branch
      %1166 = sbr.rel (0) target = $region41
    $region40: #{gin_forward.1} parent=1 // pred_region
      %1168 = dma.done [#allocation4], 32
    $region41: #{gin_forward.1} parent=1 // pred_fallthru
      _
    %1169 = vsyncpa [#allocation3], 1
    %1170 = vsyncpa [#allocation4], 1

</llo_original>
